<compile_context>
chip_gen: v6e
topology: v6e:2x2x1
jax: 0.10.0
libtpu: 0.0.40
codegen_flags: <defaults>
</compile_context>

<pallas_src>
import numpy as np
import jax
import jax.numpy as jnp
from jax.experimental import pallas as pl
from jax.experimental.pallas import tpu as pltpu

EPS = float(jnp.finfo(jnp.float32).eps)  # torch.finfo(torch.float32).eps

# Abramowitz & Stegun 4.4.49 minimax coefficients for atan on [0, 1]
# (odd polynomial in a, |err| <= 1e-5).
_A1, _A3, _A5, _A7, _A9 = (0.9998660, -0.3302995, 0.1801410, -0.0851330, 0.0208351)


def _atan2_fast(y, x):
    """atan2 from an EUP approx reciprocal + degree-9 minimax atan polynomial."""
    ax = jnp.abs(x)
    ay = jnp.abs(y)
    mx = jnp.maximum(jnp.maximum(ax, ay), 1e-30)
    mn = jnp.minimum(ax, ay)
    a = mn * pl.reciprocal(mx, approx=True)           # in [0, 1]
    s = a * a
    r = ((((_A9 * s + _A7) * s + _A5) * s + _A3) * s + _A1) * a
    r = jnp.where(ay > ax, (0.5 * jnp.pi) - r, r)     # octant -> quadrant 1
    r = jnp.where(x < 0.0, jnp.pi - r, r)             # left half-plane
    return jnp.where(y < 0.0, -r, r)                  # sign of y


def _stft_kernel(a_ref, a2_ref, wc_ref, ws_ref, mag_ref, ph_ref, lhs_ref):
    # a_ref:   (TG, L)   current tile of signal groups G[q]
    # a2_ref:  (8,  L)   first groups of the *next* tile (halo; only row 0 used)
    # w*_ref:  (K,  N)   window-folded DFT matrices, [top ; bottom] stacked on K
    # mag/ph:  (TG, N)   R frames interleaved per group row
    # lhs_ref: (TG, K)   scratch holding [G[q] | G[q+1][:kb]]
    tg, L = a_ref.shape
    kb = lhs_ref.shape[1] - L

    lhs_ref[:, :L] = a_ref[...]
    if kb:
        lhs_ref[0:tg - 1, L:] = a_ref[1:tg, 0:kb]      # G[q+1] = shifted G[q]
        lhs_ref[tg - 1:tg, L:] = a2_ref[0:1, 0:kb]     # ... except the last row
    lhs = lhs_ref[...]

    re = jnp.dot(lhs, wc_ref[...], preferred_element_type=jnp.float32)
    im = jnp.dot(lhs, ws_ref[...], preferred_element_type=jnp.float32)

    mag_ref[...] = jnp.sqrt(jnp.maximum(re * re + im * im, EPS))
    ph_ref[...] = _atan2_fast(im + EPS, re + EPS)


def _build_fused_dft(frame_len, frame_hop, window, kb):
    """Window-folded DFT matrices, [top ; bottom(:kb)] stacked along K."""
    L, hop = frame_len, frame_hop
    R = L // hop
    F = L // 2 + 1
    n = np.arange(L, dtype=np.float64)[:, None]
    k = np.arange(F, dtype=np.float64)[None, :]
    ang = 2.0 * np.pi * n * k / L
    if window == "hanning":
        # torch.hann_window (periodic): 0.5 - 0.5*cos(2*pi*n/N)
        win = 0.5 - 0.5 * np.cos(2.0 * np.pi * np.arange(L) / L)
    else:
        assert window == "none"
        win = np.ones((L,), dtype=np.float64)
    base_c = np.cos(ang) * win[:, None]
    base_s = -np.sin(ang) * win[:, None]

    N = R * F
    wc = np.zeros((L + kb, N), dtype=np.float64)
    ws = np.zeros((L + kb, N), dtype=np.float64)
    for s in range(R):
        off = s * hop
        # top block: contribution of group q
        wc[off:L, s * F:(s + 1) * F] = base_c[:L - off]
        ws[off:L, s * F:(s + 1) * F] = base_s[:L - off]
        # bottom block: contribution of group q+1 (only rows < L-hop are used)
        if off:
            wc[L:L + off, s * F:(s + 1) * F] = base_c[L - off:]
            ws[L:L + off, s * F:(s + 1) * F] = base_s[L - off:]
    return jnp.asarray(wc, jnp.float32), jnp.asarray(ws, jnp.float32)


def simple_stft_layer(x, frame_len=1024, frame_hop=256, window="hanning",
                      transpose_output=True):
    """Replicates Simple_STFT_Layer.forward: returns (mag, phase), each [B, F, NF]."""
    assert x.ndim == 2, "x must be in [B, T]"
    B, T = x.shape
    L, hop = frame_len, frame_hop
    assert T >= L, "signal shorter than one frame"
    # TODO(synk): general hop that does not divide frame_len would fall back to
    # explicit framing (not needed for the module defaults 1024/256).
    assert L % hop == 0, "frame_hop must divide frame_len"

    R = L // hop
    F = L // 2 + 1
    NF = (T - L) // hop + 1                    # center=False framing
    NGf = -(-NF // R)                          # groups hosting real frames (per batch)
    NGp = NGf + 1                              # +1 in-batch halo group
    Gb = B * NGp                               # frame-relevant flat groups
    TG = min(128, ((Gb + 7) // 8) * 8)         # groups per tile (mult of 8)
    NT = -(-Gb // TG)                          # grid steps
    G_main = NT * TG
    G_in = G_main + 8                          # +8 rows so the last tile's halo exists
    # Bottom weight block only has L-hop non-zero rows; trim K when 128-aligned.
    kb = (L - hop) if (L - hop) % 128 == 0 else L
    K = L + kb
    N = R * F

    # --- glue: per-batch zero pad to whole groups, flatten batch into M ------
    Tp = NGp * L
    xg = x[:, :Tp] if T >= Tp else jnp.pad(x, ((0, 0), (0, Tp - T)))
    groups = xg.reshape(B * NGp, L).astype(jnp.float32)
    groups = jnp.pad(groups, ((0, G_in - Gb), (0, 0)))

    wc, ws = _build_fused_dft(L, hop, window, kb)

    # --- VMEM budget: weights single-buffered, everything else double --------
    vmem_est = (2 * K * N * 4            # wc, ws (Buffered(1))
                + 2 * TG * L * 4         # signal tile, double-buffered
                + 2 * 8 * L * 4          # halo tile
                + 4 * TG * N * 4         # two outputs, double-buffered
                + TG * K * 4)            # lhs scratch
    vmem_limit = min(int(vmem_est * 1.25) + (8 << 20), 128 << 20)

    blk8 = TG // 8
    mag_raw, ph_raw = pl.pallas_call(
        _stft_kernel,
        out_shape=(
            jax.ShapeDtypeStruct((G_main, N), jnp.float32),
            jax.ShapeDtypeStruct((G_main, N), jnp.float32),
        ),
        grid=(NT,),
        in_specs=[
            pl.BlockSpec((TG, L), lambda g: (g, 0)),                        # G[q]
            pl.BlockSpec((8, L), lambda g: ((g + 1) * blk8, 0)),            # halo
            pl.BlockSpec((K, N), lambda g: (0, 0),
                         pipeline_mode=pl.Buffered(1)),                     # Wc (const)
            pl.BlockSpec((K, N), lambda g: (0, 0),
                         pipeline_mode=pl.Buffered(1)),                     # Ws (const)
        ],
        out_specs=(
            pl.BlockSpec((TG, N), lambda g: (g, 0)),
            pl.BlockSpec((TG, N), lambda g: (g, 0)),
        ),
        scratch_shapes=[pltpu.VMEM((TG, K), jnp.float32)],
        compiler_params=pltpu.CompilerParams(
            dimension_semantics=("parallel",),
            vmem_limit_bytes=vmem_limit),
    )(groups, groups, wc, ws)

    # --- glue: free reshape to frames, trim padded frames ---------------------
    mag = mag_raw[:Gb].reshape(B, NGp * R, F)[:, :NF, :]
    ph = ph_raw[:Gb].reshape(B, NGp * R, F)[:, :NF, :]
    if transpose_output:
        # torch.stft layout [B, F, n_frames]; consumers that can take frames-major
        # [B, NF, F] should pass transpose_output=False and save an HBM pass.
        return mag.transpose(0, 2, 1), ph.transpose(0, 2, 1)
    return mag, ph


if __name__ == "__main__":
    def check(x, frame_len, frame_hop, window):
        mag, phase = simple_stft_layer(x, frame_len=frame_len,
                                       frame_hop=frame_hop, window=window)
        mag, phase = jax.block_until_ready((mag, phase))

        # Reference: numpy rFFT with identical framing / window / eps math.
        B, T = x.shape
        nf = (T - frame_len) // frame_hop + 1
        starts = np.arange(nf) * frame_hop
        xr = np.asarray(x, dtype=np.float64)
        frames_np = xr[:, starts[:, None] + np.arange(frame_len)]
        if window == "hanning":
            win_np = 0.5 - 0.5 * np.cos(2.0 * np.pi * np.arange(frame_len) / frame_len)
        else:
            win_np = np.ones((frame_len,))
        spec = np.fft.rfft(frames_np * win_np, axis=-1)          # [B, NF, F]
        r, i = spec.real, spec.imag
        mag_ref = np.sqrt(np.maximum(r * r + i * i, EPS)).transpose(0, 2, 1)
        phase_ref = np.arctan2(i + EPS, r + EPS).transpose(0, 2, 1)

        assert mag.shape == mag_ref.shape and phase.shape == phase_ref.shape, \
            f"shape mismatch ({frame_len}/{frame_hop}/{window})"
        assert np.allclose(np.asarray(mag), mag_ref, rtol=1e-3, atol=1e-3), \
            f"mag mismatch ({frame_len}/{frame_hop}/{window})"
        # Wrap-safe phase comparison, only where the bin has non-trivial energy.
        dphi = np.angle(np.exp(1j * (np.asarray(phase) - phase_ref)))
        mask = mag_ref > 1e-2
        assert np.max(np.abs(dphi[mask])) < 5e-2, \
            f"phase mismatch ({frame_len}/{frame_hop}/{window})"

    # Small config, both window modes.
    x_small = jax.random.normal(jax.random.PRNGKey(0), (2, 1024), dtype=jnp.float32)
    for window in ("hanning", "none"):
        check(x_small, 256, 64, window)

    # Module-default config (exercises the K-trim path and realistic weights).
    x_def = jax.random.normal(jax.random.PRNGKey(1), (1, 4096), dtype=jnp.float32)
    check(x_def, 1024, 256, "hanning")

    print("KERNEL_OK")
</pallas_src>

<mosaic_0001>
module attributes {stable_mosaic.version = 11 : i64} {
  func.func @_stft_kernel(%arg0: i32, %arg1: memref<16x256xf32, #tpu.memory_space<vmem>>, %arg2: memref<8x256xf32, #tpu.memory_space<vmem>>, %arg3: memref<512x516xf32, #tpu.memory_space<vmem>>, %arg4: memref<512x516xf32, #tpu.memory_space<vmem>>, %arg5: memref<16x516xf32, #tpu.memory_space<vmem>>, %arg6: memref<16x516xf32, #tpu.memory_space<vmem>>, %arg7: memref<16x512xf32, #tpu.memory_space<vmem>>) attributes {dimension_semantics = [#tpu.dimension_semantics<parallel>], iteration_bounds = array<i64: 1>, scalar_prefetch = 0 : i64, scratch_operands = 1 : i64, tpu.core_type = #tpu.core_type<tc>, window_params = [{transform_indices = @transform_0, window_bounds = array<i64: 16, 256>}, {transform_indices = @transform_1, window_bounds = array<i64: 8, 256>}, {pipeline_mode = #tpu.pipeline_mode<synchronous>, transform_indices = @transform_2, window_bounds = array<i64: 512, 516>}, {pipeline_mode = #tpu.pipeline_mode<synchronous>, transform_indices = @transform_3, window_bounds = array<i64: 512, 516>}, {transform_indices = @transform_4, window_bounds = array<i64: 16, 516>}, {transform_indices = @transform_5, window_bounds = array<i64: 16, 516>}]} {
    %c0 = arith.constant 0 : index
    %c0_0 = arith.constant 0 : index
    %0 = vector.load %arg1[%c0, %c0_0] : memref<16x256xf32, #tpu.memory_space<vmem>>, vector<16x256xf32>
    %c0_1 = arith.constant 0 : index
    %c0_2 = arith.constant 0 : index
    %1 = vector.load %arg7[%c0_1, %c0_2] : memref<16x512xf32, #tpu.memory_space<vmem>>, vector<16x256xf32>
    tpu.vector_store %arg7[%c0_1, %c0_2], %0 {strides = array<i32>} : memref<16x512xf32, #tpu.memory_space<vmem>>, vector<16x256xf32>,
    %c1 = arith.constant 1 : index
    %c0_3 = arith.constant 0 : index
    %2 = vector.load %arg1[%c1, %c0_3] : memref<16x256xf32, #tpu.memory_space<vmem>>, vector<15x256xf32>
    %c0_4 = arith.constant 0 : index
    %c256 = arith.constant 256 : index
    %3 = vector.load %arg7[%c0_4, %c256] : memref<16x512xf32, #tpu.memory_space<vmem>>, vector<15x256xf32>
    tpu.vector_store %arg7[%c0_4, %c256], %2 {strides = array<i32>} : memref<16x512xf32, #tpu.memory_space<vmem>>, vector<15x256xf32>,
    %c0_5 = arith.constant 0 : index
    %c0_6 = arith.constant 0 : index
    %4 = vector.load %arg2[%c0_5, %c0_6] : memref<8x256xf32, #tpu.memory_space<vmem>>, vector<1x256xf32>
    %c15 = arith.constant 15 : index
    %c256_7 = arith.constant 256 : index
    %5 = vector.load %arg7[%c15, %c256_7] : memref<16x512xf32, #tpu.memory_space<vmem>>, vector<1x256xf32>
    tpu.vector_store %arg7[%c15, %c256_7], %4 {strides = array<i32>} : memref<16x512xf32, #tpu.memory_space<vmem>>, vector<1x256xf32>,
    %c0_8 = arith.constant 0 : index
    %c0_9 = arith.constant 0 : index
    %6 = vector.load %arg7[%c0_8, %c0_9] : memref<16x512xf32, #tpu.memory_space<vmem>>, vector<16x512xf32>
    %c0_10 = arith.constant 0 : index
    %c0_11 = arith.constant 0 : index
    %7 = vector.load %arg3[%c0_10, %c0_11] : memref<512x516xf32, #tpu.memory_space<vmem>>, vector<512x516xf32>
    %cst = arith.constant dense<0.000000e+00> : vector<16x516xf32>
    %8 = tpu.matmul %6, %7, %cst {dimension_numbers = #tpu.dot_dimension_numbers<[1], [0], [0], [1], [0, 0, 1, 1], [], []>} : vector<16x512xf32>, vector<512x516xf32>, vector<16x516xf32> -> vector<16x516xf32>
    %c0_12 = arith.constant 0 : index
    %c0_13 = arith.constant 0 : index
    %9 = vector.load %arg4[%c0_12, %c0_13] : memref<512x516xf32, #tpu.memory_space<vmem>>, vector<512x516xf32>
    %cst_14 = arith.constant dense<0.000000e+00> : vector<16x516xf32>
    %10 = tpu.matmul %6, %9, %cst_14 {dimension_numbers = #tpu.dot_dimension_numbers<[1], [0], [0], [1], [0, 0, 1, 1], [], []>} : vector<16x512xf32>, vector<512x516xf32>, vector<16x516xf32> -> vector<16x516xf32>
    %11 = arith.mulf %8, %8 : vector<16x516xf32>
    %12 = arith.mulf %10, %10 : vector<16x516xf32>
    %13 = arith.addf %11, %12 : vector<16x516xf32>
    %cst_15 = arith.constant 1.1920929E-7 : f32
    %14 = vector.broadcast %cst_15 : f32 to vector<16x516xf32>
    %15 = arith.maximumf %13, %14 : vector<16x516xf32>
    %16 = math.sqrt %15 : vector<16x516xf32>
    %c0_16 = arith.constant 0 : index
    %c0_17 = arith.constant 0 : index
    %17 = vector.load %arg5[%c0_16, %c0_17] : memref<16x516xf32, #tpu.memory_space<vmem>>, vector<16x516xf32>
    tpu.vector_store %arg5[%c0_16, %c0_17], %16 {strides = array<i32>} : memref<16x516xf32, #tpu.memory_space<vmem>>, vector<16x516xf32>,
    %cst_18 = arith.constant 1.1920929E-7 : f32
    %18 = vector.broadcast %cst_18 : f32 to vector<16x516xf32>
    %19 = arith.addf %10, %18 : vector<16x516xf32>
    %cst_19 = arith.constant 1.1920929E-7 : f32
    %20 = vector.broadcast %cst_19 : f32 to vector<16x516xf32>
    %21 = arith.addf %8, %20 : vector<16x516xf32>
    %22 = math.absf %21 : vector<16x516xf32>
    %23 = math.absf %19 : vector<16x516xf32>
    %24 = arith.maximumf %22, %23 : vector<16x516xf32>
    %cst_20 = arith.constant 1.000000e-30 : f32
    %25 = vector.broadcast %cst_20 : f32 to vector<16x516xf32>
    %26 = arith.maximumf %24, %25 : vector<16x516xf32>
    %27 = arith.minimumf %22, %23 : vector<16x516xf32>
    %28 = tpu.reciprocal %26 {approx = true} : vector<16x516xf32> -> vector<16x516xf32>
    %29 = arith.mulf %27, %28 : vector<16x516xf32>
    %30 = arith.mulf %29, %29 : vector<16x516xf32>
    %cst_21 = arith.constant 2.083510e-02 : f32
    %31 = vector.broadcast %cst_21 : f32 to vector<16x516xf32>
    %32 = arith.mulf %31, %30 : vector<16x516xf32>
    %cst_22 = arith.constant -8.513300e-02 : f32
    %33 = vector.broadcast %cst_22 : f32 to vector<16x516xf32>
    %34 = arith.addf %32, %33 : vector<16x516xf32>
    %35 = arith.mulf %34, %30 : vector<16x516xf32>
    %cst_23 = arith.constant 1.801410e-01 : f32
    %36 = vector.broadcast %cst_23 : f32 to vector<16x516xf32>
    %37 = arith.addf %35, %36 : vector<16x516xf32>
    %38 = arith.mulf %37, %30 : vector<16x516xf32>
    %cst_24 = arith.constant -0.330299497 : f32
    %39 = vector.broadcast %cst_24 : f32 to vector<16x516xf32>
    %40 = arith.addf %38, %39 : vector<16x516xf32>
    %41 = arith.mulf %40, %30 : vector<16x516xf32>
    %cst_25 = arith.constant 9.998660e-01 : f32
    %42 = vector.broadcast %cst_25 : f32 to vector<16x516xf32>
    %43 = arith.addf %41, %42 : vector<16x516xf32>
    %44 = arith.mulf %43, %29 : vector<16x516xf32>
    %45 = arith.cmpf ogt, %23, %22 : vector<16x516xf32>
    %cst_26 = arith.constant 1.57079637 : f32
    %46 = vector.broadcast %cst_26 : f32 to vector<16x516xf32>
    %47 = arith.subf %46, %44 : vector<16x516xf32>
    %48 = arith.select %45, %47, %44 : vector<16x516xi1>, vector<16x516xf32>
    %cst_27 = arith.constant 0.000000e+00 : f32
    %49 = vector.broadcast %cst_27 : f32 to vector<16x516xf32>
    %50 = arith.cmpf olt, %21, %49 : vector<16x516xf32>
    %cst_28 = arith.constant 3.14159274 : f32
    %51 = vector.broadcast %cst_28 : f32 to vector<16x516xf32>
    %52 = arith.subf %51, %48 : vector<16x516xf32>
    %53 = arith.select %50, %52, %48 : vector<16x516xi1>, vector<16x516xf32>
    %cst_29 = arith.constant 0.000000e+00 : f32
    %54 = vector.broadcast %cst_29 : f32 to vector<16x516xf32>
    %55 = arith.cmpf olt, %19, %54 : vector<16x516xf32>
    %cst_30 = arith.constant 0.000000e+00 : f32
    %56 = vector.broadcast %cst_30 : f32 to vector<16x516xf32>
    %57 = arith.subf %56, %53 : vector<16x516xf32>
    %58 = arith.select %55, %57, %53 : vector<16x516xi1>, vector<16x516xf32>
    %c0_31 = arith.constant 0 : index
    %c0_32 = arith.constant 0 : index
    %59 = vector.load %arg6[%c0_31, %c0_32] : memref<16x516xf32, #tpu.memory_space<vmem>>, vector<16x516xf32>
    tpu.vector_store %arg6[%c0_31, %c0_32], %58 {strides = array<i32>} : memref<16x516xf32, #tpu.memory_space<vmem>>, vector<16x516xf32>,
    return
  }
  func.func @transform_0(%arg0: i32) -> (i32, i32) {
    %c0_i32 = arith.constant 0 : i32
    %c0_i32_0 = arith.constant 0 : i32
    return %arg0, %c0_i32 : i32, i32
  }
  func.func @transform_1(%arg0: i32) -> (i32, i32) {
    %c1_i32 = arith.constant 1 : i32
    %0 = arith.addi %arg0, %c1_i32 : i32
    %c2_i32 = arith.constant 2 : i32
    %1 = arith.muli %0, %c2_i32 : i32
    %c0_i32 = arith.constant 0 : i32
    %c0_i32_0 = arith.constant 0 : i32
    return %1, %c0_i32 : i32, i32
  }
  func.func @transform_2(%arg0: i32) -> (i32, i32) {
    %c0_i32 = arith.constant 0 : i32
    %c0_i32_0 = arith.constant 0 : i32
    %c0_i32_1 = arith.constant 0 : i32
    return %c0_i32, %c0_i32_0 : i32, i32
  }
  func.func @transform_3(%arg0: i32) -> (i32, i32) {
    %c0_i32 = arith.constant 0 : i32
    %c0_i32_0 = arith.constant 0 : i32
    %c0_i32_1 = arith.constant 0 : i32
    return %c0_i32, %c0_i32_0 : i32, i32
  }
  func.func @transform_4(%arg0: i32) -> (i32, i32) {
    %c0_i32 = arith.constant 0 : i32
    %c0_i32_0 = arith.constant 0 : i32
    return %arg0, %c0_i32 : i32, i32
  }
  func.func @transform_5(%arg0: i32) -> (i32, i32) {
    %c0_i32 = arith.constant 0 : i32
    %c0_i32_0 = arith.constant 0 : i32
    return %arg0, %c0_i32 : i32, i32
  }
}

</mosaic_0001>

<llo_original>
// kernel: tpu_custom_call.1
$region0: #{tpu_custom_call.1}
  #allocation0 [shape = 'u32[]', space=smem, size = 0x4, offset = 0x4, fixed_abs, tag = 'smem constant byte address 0x4 - core index']
  #allocation1 [shape = 'u32[144,128]{1,0:T(1,128)}', space=vmem, size = 0x12000, scoped, tag = 'internal scratch']
  #allocation2 [shape = 'f32[16,512]{1,0:T(8,128)}', space=vmem, size = 0x8000, scoped, tag = 'scratch operand']
  %s0 = inlined_call_operand.vmem [shape: f32[24,256], index: 0, kind: input, shape index: {}]
  %s1 = inlined_call_operand.vmem [shape: f32[24,256], index: 1, kind: input, shape index: {}]
  %s2 = inlined_call_operand.vmem [shape: f32[512,516], index: 2, kind: input, shape index: {}]
  %s3 = inlined_call_operand.vmem [shape: f32[512,516], index: 3, kind: input, shape index: {}]
  %s4 = inlined_call_operand.hbm [shape: f32[16,516], index: 4, kind: output, shape index: {0}]
  %s5 = inlined_call_operand.hbm [shape: f32[16,516], index: 5, kind: output, shape index: {1}]
  %6 = xla_tuple %s4, %s5
  %s7 = sld [smem:[#allocation0]]
  $region34: #{tpu_custom_call.1} parent=0
    _
  %s9 = ssub.s32 1, %s7
  %s10 = scalar_select 0, %s9, %s7
  $region1: #{tpu_custom_call.1} parent=0
    #allocation3 [shape = 'u8[40960]{0}', space=vmem, size = 0xa000, scoped, tag = 'output window, operand 0, single buffered']
    #allocation4 [shape = 's32[1]{0}', space=sflag, size = 0x4, scoped, tag = 'scoped memory for tpu_custom_call.1']
    #allocation5 [shape = 'u8[40960]{0}', space=vmem, size = 0xa000, scoped, tag = 'output window, operand 1, single buffered']
    #allocation6 [shape = 's32[1]{0}', space=sflag, size = 0x4, scoped, tag = 'scoped memory for tpu_custom_call.1']
    %11 = vsyncpa [#allocation4], 0
    %12 = vsyncpa [#allocation6], 0
    // Predicated region
    $region2: #{tpu_custom_call.1} parent=1 // pred_check
      _
    $region3: #{tpu_custom_call.1} parent=1 // pred_check_branch
      %14 = sbr.rel (0) target = $region5
    $region4: #{tpu_custom_call.1} parent=1 // pred_region
      _
    $region5: #{tpu_custom_call.1} parent=1 // pred_fallthru
      _
    // Predicated region
    $region6: #{tpu_custom_call.1} parent=1 // pred_check
      _
    $region7: #{tpu_custom_call.1} parent=1 // pred_check_branch
      %16 = sbr.rel (0) target = $region9
    $region8: #{tpu_custom_call.1} parent=1 // pred_region
      %s17 = sadd.s32 0, 1
      %s18 = smul.u32 %s17, 2
      %p19 = scmp.lt.s32.totalorder %s18, 2
      %s20 = scalar_select %p19, %s18, 2
      %s21 = smul.addr %s20, 2
      %s22 = smul.addr %s21, 8
      %s23 = scalar_lea.vmem %s1, %s22
      %s24 = sadd.s32 0, 1
      %s25 = smul.u32 %s24, 2
    $region9: #{tpu_custom_call.1} parent=1 // pred_fallthru
      _
    // Predicated region
    $region10: #{tpu_custom_call.1} parent=1 // pred_check
      _
    $region11: #{tpu_custom_call.1} parent=1 // pred_check_branch
      %27 = sbr.rel (0) target = $region13
    $region12: #{tpu_custom_call.1} parent=1 // pred_region
      _
    $region13: #{tpu_custom_call.1} parent=1 // pred_fallthru
      _
    // Predicated region
    $region14: #{tpu_custom_call.1} parent=1 // pred_check
      _
    $region15: #{tpu_custom_call.1} parent=1 // pred_check_branch
      %29 = sbr.rel (0) target = $region17
    $region16: #{tpu_custom_call.1} parent=1 // pred_region
      _
    $region17: #{tpu_custom_call.1} parent=1 // pred_fallthru
      _
    %s30 = sadd.s32 0, 1
    %s31 = smul.u32 %s30, 2
    %p32 = scmp.lt.s32.totalorder %s31, 2
    %s33 = scalar_select %p32, %s31, 2
    %s34 = smul.addr %s33, 2
    %s35 = smul.addr %s34, 8
    %s36 = scalar_lea.vmem %s1, %s35
    %s37 = sadd.s32 0, 1
    %s38 = smul.u32 %s37, 2
    %p39 = scmp.lt.s32.totalorder %s38, 2
    %s40 = scalar_select %p39, %s38, 2
    %s41 = smul.addr %s40, 2
    %s42 = smul.addr %s41, 8
    %s43 = scalar_lea.vmem %s1, %s42
    %s44 = sadd.s32 0, 1
    %s45 = smul.u32 %s44, 2
    %v46 = vld [vmem:[%s0] sm:$0xff]
    %v47 = vld [vmem:[%s0 + $0x8] sm:$0xff]
    %v48 = vld [vmem:[%s0 + $0x10] sm:$0xff]
    %v49 = vld [vmem:[%s0 + $0x18] sm:$0xff]
    %50 = vst [vmem:[#allocation2] sm:$0xff] %v46
    %51 = vst [vmem:[#allocation2 + $0x8] sm:$0xff] %v47
    %52 = vst [vmem:[#allocation2 + $0x20] sm:$0xff] %v48
    %53 = vst [vmem:[#allocation2 + $0x28] sm:$0xff] %v49
    %v54 = vld [vmem:[%s0] sm:$0xfe]
    %v55 = vld [vmem:[%s0 + $0x8] sm:$0xfe]
    %v56 = vld [vmem:[%s0 + $0x10] sm:$0xff]
    %v57 = vld [vmem:[%s0 + $0x18] sm:$0xff]
    %vm62 = vcmask 1046528
    %v63 = vrot.slane %v54, 1
    %v64 = vrot.slane %v56, 1
    %v65 = vsel %vm62, %v63, %v64
    %v66 = vrot.slane %v55, 1
    %v67 = vrot.slane %v57, 1
    %v68 = vsel %vm62, %v66, %v67
    %73 = vst [vmem:[#allocation2 + $0x10] sm:$0xff] %v65
    %74 = vst [vmem:[#allocation2 + $0x18] sm:$0xff] %v68
    %75 = vst [vmem:[#allocation2 + $0x30] sm:$0x7f] %v64
    %76 = vst [vmem:[#allocation2 + $0x38] sm:$0x7f] %v67
    %v77 = vld [vmem:[%s43] ss:$8 sm:$0x3]
    %v78 = vlaneseq
    %vm79 = vcmp.ge.s32.totalorder %v78, 0
    %vm80 = vcmp.lt.s32.totalorder %v78, 256
    %vm81 = vmand %vm79, %vm80
    %s82 = scalar_lea.vmem [#allocation2], 55
    %83 = vst.msk [vmem:[%s82] ss:$8 sm:$0x3] %vm81, %v77
    %84 = vst.msk [vmem:[%s82] ss:$8 sm:$0x0] %vm81, %v77
    %v85 = vld [vmem:[#allocation2] sm:$0xff]
    %v86 = vld [vmem:[#allocation2 + $0x8] sm:$0xff]
    %v87 = vld [vmem:[#allocation2 + $0x10] sm:$0xff]
    %v88 = vld [vmem:[#allocation2 + $0x18] sm:$0xff]
    %v89 = vld [vmem:[#allocation2 + $0x20] sm:$0xff]
    %v90 = vld [vmem:[#allocation2 + $0x28] sm:$0xff]
    %v91 = vld [vmem:[#allocation2 + $0x30] sm:$0xff]
    %v92 = vld [vmem:[#allocation2 + $0x38] sm:$0xff]
    %v93 = vld [vmem:[%s2] sm:$0xff]
    %v94 = vld [vmem:[%s2 + $0x8] sm:$0xff]
    %v95 = vld [vmem:[%s2 + $0x10] sm:$0xff]
    %v96 = vld [vmem:[%s2 + $0x18] sm:$0xff]
    %v97 = vld [vmem:[%s2 + $0x20] sm:$0xff]
    %v98 = vld [vmem:[%s2 + $0x28] sm:$0xff]
    %v99 = vld [vmem:[%s2 + $0x30] sm:$0xff]
    %v100 = vld [vmem:[%s2 + $0x38] sm:$0xff]
    %v101 = vld [vmem:[%s2 + $0x40] sm:$0xff]
    %v102 = vld [vmem:[%s2 + $0x48] sm:$0xff]
    %v103 = vld [vmem:[%s2 + $0x50] sm:$0xff]
    %v104 = vld [vmem:[%s2 + $0x58] sm:$0xff]
    %v105 = vld [vmem:[%s2 + $0x60] sm:$0xff]
    %v106 = vld [vmem:[%s2 + $0x68] sm:$0xff]
    %v107 = vld [vmem:[%s2 + $0x70] sm:$0xff]
    %v108 = vld [vmem:[%s2 + $0x78] sm:$0xff]
    %v109 = vld [vmem:[%s2 + $0x80] sm:$0xff]
    %v110 = vld [vmem:[%s2 + $0x88] sm:$0xff]
    %v111 = vld [vmem:[%s2 + $0x90] sm:$0xff]
    %v112 = vld [vmem:[%s2 + $0x98] sm:$0xff]
    %v113 = vld [vmem:[%s2 + $0xa0] sm:$0xff]
    %v114 = vld [vmem:[%s2 + $0xa8] sm:$0xff]
    %v115 = vld [vmem:[%s2 + $0xb0] sm:$0xff]
    %v116 = vld [vmem:[%s2 + $0xb8] sm:$0xff]
    %v117 = vld [vmem:[%s2 + $0xc0] sm:$0xff]
    %v118 = vld [vmem:[%s2 + $0xc8] sm:$0xff]
    %v119 = vld [vmem:[%s2 + $0xd0] sm:$0xff]
    %v120 = vld [vmem:[%s2 + $0xd8] sm:$0xff]
    %v121 = vld [vmem:[%s2 + $0xe0] sm:$0xff]
    %v122 = vld [vmem:[%s2 + $0xe8] sm:$0xff]
    %v123 = vld [vmem:[%s2 + $0xf0] sm:$0xff]
    %v124 = vld [vmem:[%s2 + $0xf8] sm:$0xff]
    %v125 = vld [vmem:[%s2 + $0x100] sm:$0xff]
    %v126 = vld [vmem:[%s2 + $0x108] sm:$0xff]
    %v127 = vld [vmem:[%s2 + $0x110] sm:$0xff]
    %v128 = vld [vmem:[%s2 + $0x118] sm:$0xff]
    %v129 = vld [vmem:[%s2 + $0x120] sm:$0xff]
    %v130 = vld [vmem:[%s2 + $0x128] sm:$0xff]
    %v131 = vld [vmem:[%s2 + $0x130] sm:$0xff]
    %v132 = vld [vmem:[%s2 + $0x138] sm:$0xff]
    %v133 = vld [vmem:[%s2 + $0x140] sm:$0xff]
    %v134 = vld [vmem:[%s2 + $0x148] sm:$0xff]
    %v135 = vld [vmem:[%s2 + $0x150] sm:$0xff]
    %v136 = vld [vmem:[%s2 + $0x158] sm:$0xff]
    %v137 = vld [vmem:[%s2 + $0x160] sm:$0xff]
    %v138 = vld [vmem:[%s2 + $0x168] sm:$0xff]
    %v139 = vld [vmem:[%s2 + $0x170] sm:$0xff]
    %v140 = vld [vmem:[%s2 + $0x178] sm:$0xff]
    %v141 = vld [vmem:[%s2 + $0x180] sm:$0xff]
    %v142 = vld [vmem:[%s2 + $0x188] sm:$0xff]
    %v143 = vld [vmem:[%s2 + $0x190] sm:$0xff]
    %v144 = vld [vmem:[%s2 + $0x198] sm:$0xff]
    %v145 = vld [vmem:[%s2 + $0x1a0] sm:$0xff]
    %v146 = vld [vmem:[%s2 + $0x1a8] sm:$0xff]
    %v147 = vld [vmem:[%s2 + $0x1b0] sm:$0xff]
    %v148 = vld [vmem:[%s2 + $0x1b8] sm:$0xff]
    %v149 = vld [vmem:[%s2 + $0x1c0] sm:$0xff]
    %v150 = vld [vmem:[%s2 + $0x1c8] sm:$0xff]
    %v151 = vld [vmem:[%s2 + $0x1d0] sm:$0xff]
    %v152 = vld [vmem:[%s2 + $0x1d8] sm:$0xff]
    %v153 = vld [vmem:[%s2 + $0x1e0] sm:$0xff]
    %v154 = vld [vmem:[%s2 + $0x1e8] sm:$0xff]
    %v155 = vld [vmem:[%s2 + $0x1f0] sm:$0xff]
    %v156 = vld [vmem:[%s2 + $0x1f8] sm:$0xff]
    %v157 = vld [vmem:[%s2 + $0x200] sm:$0xff]
    %v158 = vld [vmem:[%s2 + $0x208] sm:$0xff]
    %v159 = vld [vmem:[%s2 + $0x210] sm:$0xff]
    %v160 = vld [vmem:[%s2 + $0x218] sm:$0xff]
    %v161 = vld [vmem:[%s2 + $0x220] sm:$0xff]
    %v162 = vld [vmem:[%s2 + $0x228] sm:$0xff]
    %v163 = vld [vmem:[%s2 + $0x230] sm:$0xff]
    %v164 = vld [vmem:[%s2 + $0x238] sm:$0xff]
    %v165 = vld [vmem:[%s2 + $0x240] sm:$0xff]
    %v166 = vld [vmem:[%s2 + $0x248] sm:$0xff]
    %v167 = vld [vmem:[%s2 + $0x250] sm:$0xff]
    %v168 = vld [vmem:[%s2 + $0x258] sm:$0xff]
    %v169 = vld [vmem:[%s2 + $0x260] sm:$0xff]
    %v170 = vld [vmem:[%s2 + $0x268] sm:$0xff]
    %v171 = vld [vmem:[%s2 + $0x270] sm:$0xff]
    %v172 = vld [vmem:[%s2 + $0x278] sm:$0xff]
    %v173 = vld [vmem:[%s2 + $0x280] sm:$0xff]
    %v174 = vld [vmem:[%s2 + $0x288] sm:$0xff]
    %v175 = vld [vmem:[%s2 + $0x290] sm:$0xff]
    %v176 = vld [vmem:[%s2 + $0x298] sm:$0xff]
    %v177 = vld [vmem:[%s2 + $0x2a0] sm:$0xff]
    %v178 = vld [vmem:[%s2 + $0x2a8] sm:$0xff]
    %v179 = vld [vmem:[%s2 + $0x2b0] sm:$0xff]
    %v180 = vld [vmem:[%s2 + $0x2b8] sm:$0xff]
    %v181 = vld [vmem:[%s2 + $0x2c0] sm:$0xff]
    %v182 = vld [vmem:[%s2 + $0x2c8] sm:$0xff]
    %v183 = vld [vmem:[%s2 + $0x2d0] sm:$0xff]
    %v184 = vld [vmem:[%s2 + $0x2d8] sm:$0xff]
    %v185 = vld [vmem:[%s2 + $0x2e0] sm:$0xff]
    %v186 = vld [vmem:[%s2 + $0x2e8] sm:$0xff]
    %v187 = vld [vmem:[%s2 + $0x2f0] sm:$0xff]
    %v188 = vld [vmem:[%s2 + $0x2f8] sm:$0xff]
    %v189 = vld [vmem:[%s2 + $0x300] sm:$0xff]
    %v190 = vld [vmem:[%s2 + $0x308] sm:$0xff]
    %v191 = vld [vmem:[%s2 + $0x310] sm:$0xff]
    %v192 = vld [vmem:[%s2 + $0x318] sm:$0xff]
    %v193 = vld [vmem:[%s2 + $0x320] sm:$0xff]
    %v194 = vld [vmem:[%s2 + $0x328] sm:$0xff]
    %v195 = vld [vmem:[%s2 + $0x330] sm:$0xff]
    %v196 = vld [vmem:[%s2 + $0x338] sm:$0xff]
    %v197 = vld [vmem:[%s2 + $0x340] sm:$0xff]
    %v198 = vld [vmem:[%s2 + $0x348] sm:$0xff]
    %v199 = vld [vmem:[%s2 + $0x350] sm:$0xff]
    %v200 = vld [vmem:[%s2 + $0x358] sm:$0xff]
    %v201 = vld [vmem:[%s2 + $0x360] sm:$0xff]
    %v202 = vld [vmem:[%s2 + $0x368] sm:$0xff]
    %v203 = vld [vmem:[%s2 + $0x370] sm:$0xff]
    %v204 = vld [vmem:[%s2 + $0x378] sm:$0xff]
    %v205 = vld [vmem:[%s2 + $0x380] sm:$0xff]
    %v206 = vld [vmem:[%s2 + $0x388] sm:$0xff]
    %v207 = vld [vmem:[%s2 + $0x390] sm:$0xff]
    %v208 = vld [vmem:[%s2 + $0x398] sm:$0xff]
    %v209 = vld [vmem:[%s2 + $0x3a0] sm:$0xff]
    %v210 = vld [vmem:[%s2 + $0x3a8] sm:$0xff]
    %v211 = vld [vmem:[%s2 + $0x3b0] sm:$0xff]
    %v212 = vld [vmem:[%s2 + $0x3b8] sm:$0xff]
    %v213 = vld [vmem:[%s2 + $0x3c0] sm:$0xff]
    %v214 = vld [vmem:[%s2 + $0x3c8] sm:$0xff]
    %v215 = vld [vmem:[%s2 + $0x3d0] sm:$0xff]
    %v216 = vld [vmem:[%s2 + $0x3d8] sm:$0xff]
    %v217 = vld [vmem:[%s2 + $0x3e0] sm:$0xff]
    %v218 = vld [vmem:[%s2 + $0x3e8] sm:$0xff]
    %v219 = vld [vmem:[%s2 + $0x3f0] sm:$0xff]
    %v220 = vld [vmem:[%s2 + $0x3f8] sm:$0xff]
    %v221 = vld [vmem:[%s2 + $0x400] sm:$0xff]
    %v222 = vld [vmem:[%s2 + $0x408] sm:$0xff]
    %v223 = vld [vmem:[%s2 + $0x410] sm:$0xff]
    %v224 = vld [vmem:[%s2 + $0x418] sm:$0xff]
    %v225 = vld [vmem:[%s2 + $0x420] sm:$0xff]
    %v226 = vld [vmem:[%s2 + $0x428] sm:$0xff]
    %v227 = vld [vmem:[%s2 + $0x430] sm:$0xff]
    %v228 = vld [vmem:[%s2 + $0x438] sm:$0xff]
    %v229 = vld [vmem:[%s2 + $0x440] sm:$0xff]
    %v230 = vld [vmem:[%s2 + $0x448] sm:$0xff]
    %v231 = vld [vmem:[%s2 + $0x450] sm:$0xff]
    %v232 = vld [vmem:[%s2 + $0x458] sm:$0xff]
    %v233 = vld [vmem:[%s2 + $0x460] sm:$0xff]
    %v234 = vld [vmem:[%s2 + $0x468] sm:$0xff]
    %v235 = vld [vmem:[%s2 + $0x470] sm:$0xff]
    %v236 = vld [vmem:[%s2 + $0x478] sm:$0xff]
    %v237 = vld [vmem:[%s2 + $0x480] sm:$0xff]
    %v238 = vld [vmem:[%s2 + $0x488] sm:$0xff]
    %v239 = vld [vmem:[%s2 + $0x490] sm:$0xff]
    %v240 = vld [vmem:[%s2 + $0x498] sm:$0xff]
    %v241 = vld [vmem:[%s2 + $0x4a0] sm:$0xff]
    %v242 = vld [vmem:[%s2 + $0x4a8] sm:$0xff]
    %v243 = vld [vmem:[%s2 + $0x4b0] sm:$0xff]
    %v244 = vld [vmem:[%s2 + $0x4b8] sm:$0xff]
    %v245 = vld [vmem:[%s2 + $0x4c0] sm:$0xff]
    %v246 = vld [vmem:[%s2 + $0x4c8] sm:$0xff]
    %v247 = vld [vmem:[%s2 + $0x4d0] sm:$0xff]
    %v248 = vld [vmem:[%s2 + $0x4d8] sm:$0xff]
    %v249 = vld [vmem:[%s2 + $0x4e0] sm:$0xff]
    %v250 = vld [vmem:[%s2 + $0x4e8] sm:$0xff]
    %v251 = vld [vmem:[%s2 + $0x4f0] sm:$0xff]
    %v252 = vld [vmem:[%s2 + $0x4f8] sm:$0xff]
    %v253 = vld [vmem:[%s2 + $0x500] sm:$0xff]
    %v254 = vld [vmem:[%s2 + $0x508] sm:$0xff]
    %v255 = vld [vmem:[%s2 + $0x510] sm:$0xff]
    %v256 = vld [vmem:[%s2 + $0x518] sm:$0xff]
    %v257 = vld [vmem:[%s2 + $0x520] sm:$0xff]
    %v258 = vld [vmem:[%s2 + $0x528] sm:$0xff]
    %v259 = vld [vmem:[%s2 + $0x530] sm:$0xff]
    %v260 = vld [vmem:[%s2 + $0x538] sm:$0xff]
    %v261 = vld [vmem:[%s2 + $0x540] sm:$0xff]
    %v262 = vld [vmem:[%s2 + $0x548] sm:$0xff]
    %v263 = vld [vmem:[%s2 + $0x550] sm:$0xff]
    %v264 = vld [vmem:[%s2 + $0x558] sm:$0xff]
    %v265 = vld [vmem:[%s2 + $0x560] sm:$0xff]
    %v266 = vld [vmem:[%s2 + $0x568] sm:$0xff]
    %v267 = vld [vmem:[%s2 + $0x570] sm:$0xff]
    %v268 = vld [vmem:[%s2 + $0x578] sm:$0xff]
    %v269 = vld [vmem:[%s2 + $0x580] sm:$0xff]
    %v270 = vld [vmem:[%s2 + $0x588] sm:$0xff]
    %v271 = vld [vmem:[%s2 + $0x590] sm:$0xff]
    %v272 = vld [vmem:[%s2 + $0x598] sm:$0xff]
    %v273 = vld [vmem:[%s2 + $0x5a0] sm:$0xff]
    %v274 = vld [vmem:[%s2 + $0x5a8] sm:$0xff]
    %v275 = vld [vmem:[%s2 + $0x5b0] sm:$0xff]
    %v276 = vld [vmem:[%s2 + $0x5b8] sm:$0xff]
    %v277 = vld [vmem:[%s2 + $0x5c0] sm:$0xff]
    %v278 = vld [vmem:[%s2 + $0x5c8] sm:$0xff]
    %v279 = vld [vmem:[%s2 + $0x5d0] sm:$0xff]
    %v280 = vld [vmem:[%s2 + $0x5d8] sm:$0xff]
    %v281 = vld [vmem:[%s2 + $0x5e0] sm:$0xff]
    %v282 = vld [vmem:[%s2 + $0x5e8] sm:$0xff]
    %v283 = vld [vmem:[%s2 + $0x5f0] sm:$0xff]
    %v284 = vld [vmem:[%s2 + $0x5f8] sm:$0xff]
    %v285 = vld [vmem:[%s2 + $0x600] sm:$0xff]
    %v286 = vld [vmem:[%s2 + $0x608] sm:$0xff]
    %v287 = vld [vmem:[%s2 + $0x610] sm:$0xff]
    %v288 = vld [vmem:[%s2 + $0x618] sm:$0xff]
    %v289 = vld [vmem:[%s2 + $0x620] sm:$0xff]
    %v290 = vld [vmem:[%s2 + $0x628] sm:$0xff]
    %v291 = vld [vmem:[%s2 + $0x630] sm:$0xff]
    %v292 = vld [vmem:[%s2 + $0x638] sm:$0xff]
    %v293 = vld [vmem:[%s2 + $0x640] sm:$0xff]
    %v294 = vld [vmem:[%s2 + $0x648] sm:$0xff]
    %v295 = vld [vmem:[%s2 + $0x650] sm:$0xff]
    %v296 = vld [vmem:[%s2 + $0x658] sm:$0xff]
    %v297 = vld [vmem:[%s2 + $0x660] sm:$0xff]
    %v298 = vld [vmem:[%s2 + $0x668] sm:$0xff]
    %v299 = vld [vmem:[%s2 + $0x670] sm:$0xff]
    %v300 = vld [vmem:[%s2 + $0x678] sm:$0xff]
    %v301 = vld [vmem:[%s2 + $0x680] sm:$0xff]
    %v302 = vld [vmem:[%s2 + $0x688] sm:$0xff]
    %v303 = vld [vmem:[%s2 + $0x690] sm:$0xff]
    %v304 = vld [vmem:[%s2 + $0x698] sm:$0xff]
    %v305 = vld [vmem:[%s2 + $0x6a0] sm:$0xff]
    %v306 = vld [vmem:[%s2 + $0x6a8] sm:$0xff]
    %v307 = vld [vmem:[%s2 + $0x6b0] sm:$0xff]
    %v308 = vld [vmem:[%s2 + $0x6b8] sm:$0xff]
    %v309 = vld [vmem:[%s2 + $0x6c0] sm:$0xff]
    %v310 = vld [vmem:[%s2 + $0x6c8] sm:$0xff]
    %v311 = vld [vmem:[%s2 + $0x6d0] sm:$0xff]
    %v312 = vld [vmem:[%s2 + $0x6d8] sm:$0xff]
    %v313 = vld [vmem:[%s2 + $0x6e0] sm:$0xff]
    %v314 = vld [vmem:[%s2 + $0x6e8] sm:$0xff]
    %v315 = vld [vmem:[%s2 + $0x6f0] sm:$0xff]
    %v316 = vld [vmem:[%s2 + $0x6f8] sm:$0xff]
    %v317 = vld [vmem:[%s2 + $0x700] sm:$0xff]
    %v318 = vld [vmem:[%s2 + $0x708] sm:$0xff]
    %v319 = vld [vmem:[%s2 + $0x710] sm:$0xff]
    %v320 = vld [vmem:[%s2 + $0x718] sm:$0xff]
    %v321 = vld [vmem:[%s2 + $0x720] sm:$0xff]
    %v322 = vld [vmem:[%s2 + $0x728] sm:$0xff]
    %v323 = vld [vmem:[%s2 + $0x730] sm:$0xff]
    %v324 = vld [vmem:[%s2 + $0x738] sm:$0xff]
    %v325 = vld [vmem:[%s2 + $0x740] sm:$0xff]
    %v326 = vld [vmem:[%s2 + $0x748] sm:$0xff]
    %v327 = vld [vmem:[%s2 + $0x750] sm:$0xff]
    %v328 = vld [vmem:[%s2 + $0x758] sm:$0xff]
    %v329 = vld [vmem:[%s2 + $0x760] sm:$0xff]
    %v330 = vld [vmem:[%s2 + $0x768] sm:$0xff]
    %v331 = vld [vmem:[%s2 + $0x770] sm:$0xff]
    %v332 = vld [vmem:[%s2 + $0x778] sm:$0xff]
    %v333 = vld [vmem:[%s2 + $0x780] sm:$0xff]
    %v334 = vld [vmem:[%s2 + $0x788] sm:$0xff]
    %v335 = vld [vmem:[%s2 + $0x790] sm:$0xff]
    %v336 = vld [vmem:[%s2 + $0x798] sm:$0xff]
    %v337 = vld [vmem:[%s2 + $0x7a0] sm:$0xff]
    %v338 = vld [vmem:[%s2 + $0x7a8] sm:$0xff]
    %v339 = vld [vmem:[%s2 + $0x7b0] sm:$0xff]
    %v340 = vld [vmem:[%s2 + $0x7b8] sm:$0xff]
    %v341 = vld [vmem:[%s2 + $0x7c0] sm:$0xff]
    %v342 = vld [vmem:[%s2 + $0x7c8] sm:$0xff]
    %v343 = vld [vmem:[%s2 + $0x7d0] sm:$0xff]
    %v344 = vld [vmem:[%s2 + $0x7d8] sm:$0xff]
    %v345 = vld [vmem:[%s2 + $0x7e0] sm:$0xff]
    %v346 = vld [vmem:[%s2 + $0x7e8] sm:$0xff]
    %v347 = vld [vmem:[%s2 + $0x7f0] sm:$0xff]
    %v348 = vld [vmem:[%s2 + $0x7f8] sm:$0xff]
    %v349 = vld [vmem:[%s2 + $0x800] sm:$0xff]
    %v350 = vld [vmem:[%s2 + $0x808] sm:$0xff]
    %v351 = vld [vmem:[%s2 + $0x810] sm:$0xff]
    %v352 = vld [vmem:[%s2 + $0x818] sm:$0xff]
    %v353 = vld [vmem:[%s2 + $0x820] sm:$0xff]
    %v354 = vld [vmem:[%s2 + $0x828] sm:$0xff]
    %v355 = vld [vmem:[%s2 + $0x830] sm:$0xff]
    %v356 = vld [vmem:[%s2 + $0x838] sm:$0xff]
    %v357 = vld [vmem:[%s2 + $0x840] sm:$0xff]
    %v358 = vld [vmem:[%s2 + $0x848] sm:$0xff]
    %v359 = vld [vmem:[%s2 + $0x850] sm:$0xff]
    %v360 = vld [vmem:[%s2 + $0x858] sm:$0xff]
    %v361 = vld [vmem:[%s2 + $0x860] sm:$0xff]
    %v362 = vld [vmem:[%s2 + $0x868] sm:$0xff]
    %v363 = vld [vmem:[%s2 + $0x870] sm:$0xff]
    %v364 = vld [vmem:[%s2 + $0x878] sm:$0xff]
    %v365 = vld [vmem:[%s2 + $0x880] sm:$0xff]
    %v366 = vld [vmem:[%s2 + $0x888] sm:$0xff]
    %v367 = vld [vmem:[%s2 + $0x890] sm:$0xff]
    %v368 = vld [vmem:[%s2 + $0x898] sm:$0xff]
    %v369 = vld [vmem:[%s2 + $0x8a0] sm:$0xff]
    %v370 = vld [vmem:[%s2 + $0x8a8] sm:$0xff]
    %v371 = vld [vmem:[%s2 + $0x8b0] sm:$0xff]
    %v372 = vld [vmem:[%s2 + $0x8b8] sm:$0xff]
    %v373 = vld [vmem:[%s2 + $0x8c0] sm:$0xff]
    %v374 = vld [vmem:[%s2 + $0x8c8] sm:$0xff]
    %v375 = vld [vmem:[%s2 + $0x8d0] sm:$0xff]
    %v376 = vld [vmem:[%s2 + $0x8d8] sm:$0xff]
    %v377 = vld [vmem:[%s2 + $0x8e0] sm:$0xff]
    %v378 = vld [vmem:[%s2 + $0x8e8] sm:$0xff]
    %v379 = vld [vmem:[%s2 + $0x8f0] sm:$0xff]
    %v380 = vld [vmem:[%s2 + $0x8f8] sm:$0xff]
    %v381 = vld [vmem:[%s2 + $0x900] sm:$0xff]
    %v382 = vld [vmem:[%s2 + $0x908] sm:$0xff]
    %v383 = vld [vmem:[%s2 + $0x910] sm:$0xff]
    %v384 = vld [vmem:[%s2 + $0x918] sm:$0xff]
    %v385 = vld [vmem:[%s2 + $0x920] sm:$0xff]
    %v386 = vld [vmem:[%s2 + $0x928] sm:$0xff]
    %v387 = vld [vmem:[%s2 + $0x930] sm:$0xff]
    %v388 = vld [vmem:[%s2 + $0x938] sm:$0xff]
    %v389 = vld [vmem:[%s2 + $0x940] sm:$0xff]
    %v390 = vld [vmem:[%s2 + $0x948] sm:$0xff]
    %v391 = vld [vmem:[%s2 + $0x950] sm:$0xff]
    %v392 = vld [vmem:[%s2 + $0x958] sm:$0xff]
    %v393 = vld [vmem:[%s2 + $0x960] sm:$0xff]
    %v394 = vld [vmem:[%s2 + $0x968] sm:$0xff]
    %v395 = vld [vmem:[%s2 + $0x970] sm:$0xff]
    %v396 = vld [vmem:[%s2 + $0x978] sm:$0xff]
    %v397 = vld [vmem:[%s2 + $0x980] sm:$0xff]
    %v398 = vld [vmem:[%s2 + $0x988] sm:$0xff]
    %v399 = vld [vmem:[%s2 + $0x990] sm:$0xff]
    %v400 = vld [vmem:[%s2 + $0x998] sm:$0xff]
    %v401 = vld [vmem:[%s2 + $0x9a0] sm:$0xff]
    %v402 = vld [vmem:[%s2 + $0x9a8] sm:$0xff]
    %v403 = vld [vmem:[%s2 + $0x9b0] sm:$0xff]
    %v404 = vld [vmem:[%s2 + $0x9b8] sm:$0xff]
    %v405 = vld [vmem:[%s2 + $0x9c0] sm:$0xff]
    %v406 = vld [vmem:[%s2 + $0x9c8] sm:$0xff]
    %v407 = vld [vmem:[%s2 + $0x9d0] sm:$0xff]
    %v408 = vld [vmem:[%s2 + $0x9d8] sm:$0xff]
    %v409 = vld [vmem:[%s2 + $0x9e0] sm:$0xff]
    %v410 = vld [vmem:[%s2 + $0x9e8] sm:$0xff]
    %v411 = vld [vmem:[%s2 + $0x9f0] sm:$0xff]
    %v412 = vld [vmem:[%s2 + $0x9f8] sm:$0xff]
    %413 = vmatprep.subr.mxu0 %v169
    %414 = vmatpush1.msra.mxu0 %v168
    %415 = vmatprep.subr.mxu0 %v164
    %416 = vmatpush1.msra.mxu0 %v163
    %417 = vmatprep.subr.mxu0 %v159
    %418 = vmatpush1.msra.mxu0 %v158
    %419 = vmatprep.subr.mxu0 %v154
    %420 = vmatpush1.msra.mxu0 %v153
    %421 = vmatprep.subr.mxu0 %v149
    %422 = vmatpush1.msra.mxu0 %v148
    %423 = vmatprep.subr.mxu0 %v144
    %424 = vmatpush1.msra.mxu0 %v143
    %425 = vmatprep.subr.mxu0 %v139
    %426 = vmatpush1.msra.mxu0 %v138
    %427 = vmatprep.subr.mxu0 %v134
    %428 = vmatpush1.msra.mxu0 %v133
    %429 = vmatprep.subr.mxu0 %v129
    %430 = vmatpush1.msra.mxu0 %v128
    %431 = vmatprep.subr.mxu0 %v124
    %432 = vmatpush1.msra.mxu0 %v123
    %433 = vmatprep.subr.mxu0 %v119
    %434 = vmatpush1.msra.mxu0 %v118
    %435 = vmatprep.subr.mxu0 %v114
    %436 = vmatpush1.msra.mxu0 %v113
    %437 = vmatprep.subr.mxu0 %v109
    %438 = vmatpush1.msra.mxu0 %v108
    %439 = vmatprep.subr.mxu0 %v104
    %440 = vmatpush1.msra.mxu0 %v103
    %441 = vmatprep.subr.mxu0 %v99
    %442 = vmatpush1.msra.mxu0 %v98
    %443 = vmatprep.subr.mxu0 %v94
    %444 = vmatpush1.msra.mxu0 %v93
    %445 = vmatprep.subr.mxu0 %v249
    %446 = vmatpush2.msra.mxu0 %v248
    %447 = vmatprep.subr.mxu0 %v244
    %448 = vmatpush2.msra.mxu0 %v243
    %449 = vmatprep.subr.mxu0 %v239
    %450 = vmatpush2.msra.mxu0 %v238
    %451 = vmatprep.subr.mxu0 %v234
    %452 = vmatpush2.msra.mxu0 %v233
    %453 = vmatprep.subr.mxu0 %v229
    %454 = vmatpush2.msra.mxu0 %v228
    %455 = vmatprep.subr.mxu0 %v224
    %456 = vmatpush2.msra.mxu0 %v223
    %457 = vmatprep.subr.mxu0 %v219
    %458 = vmatpush2.msra.mxu0 %v218
    %459 = vmatprep.subr.mxu0 %v214
    %460 = vmatpush2.msra.mxu0 %v213
    %461 = vmatprep.subr.mxu0 %v209
    %462 = vmatpush2.msra.mxu0 %v208
    %463 = vmatprep.subr.mxu0 %v204
    %464 = vmatpush2.msra.mxu0 %v203
    %465 = vmatprep.subr.mxu0 %v199
    %466 = vmatpush2.msra.mxu0 %v198
    %467 = vmatprep.subr.mxu0 %v194
    %468 = vmatpush2.msra.mxu0 %v193
    %469 = vmatprep.subr.mxu0 %v189
    %470 = vmatpush2.msra.mxu0 %v188
    %471 = vmatprep.subr.mxu0 %v184
    %472 = vmatpush2.msra.mxu0 %v183
    %473 = vmatprep.subr.mxu0 %v179
    %474 = vmatpush2.msra.mxu0 %v178
    %475 = vmatprep.subr.mxu0 %v174
    %476 = vmatpush2.msra.mxu0 %v173
    %477 = vmatprep.mubr.f32.mxu0 %v86
    %478 = vmatmul.mubr.f32.gmra.mxu0 %v85
    %v479 = vpop.f32.mrf.mxu0
    %v480 = vadd.f32 0.0, %v479
    %v481 = vpop.f32.mrf.mxu0
    %v482 = vadd.f32 0.0, %v481
    %483 = vmatprep.mubr.f32.mxu0 %v90
    %484 = vmatmul.mubr.f32.gmra.mxu0 %v89
    %v485 = vpop.f32.mrf.mxu0
    %v486 = vadd.f32 0.0, %v485
    %v487 = vpop.f32.mrf.mxu0
    %v488 = vadd.f32 0.0, %v487
    %489 = vdwg.mxu0
    %490 = vmatprep.subr.mxu0 %v329
    %491 = vmatpush1.msra.mxu0 %v328
    %492 = vmatprep.subr.mxu0 %v324
    %493 = vmatpush1.msra.mxu0 %v323
    %494 = vmatprep.subr.mxu0 %v319
    %495 = vmatpush1.msra.mxu0 %v318
    %496 = vmatprep.subr.mxu0 %v314
    %497 = vmatpush1.msra.mxu0 %v313
    %498 = vmatprep.subr.mxu0 %v309
    %499 = vmatpush1.msra.mxu0 %v308
    %500 = vmatprep.subr.mxu0 %v304
    %501 = vmatpush1.msra.mxu0 %v303
    %502 = vmatprep.subr.mxu0 %v299
    %503 = vmatpush1.msra.mxu0 %v298
    %504 = vmatprep.subr.mxu0 %v294
    %505 = vmatpush1.msra.mxu0 %v293
    %506 = vmatprep.subr.mxu0 %v289
    %507 = vmatpush1.msra.mxu0 %v288
    %508 = vmatprep.subr.mxu0 %v284
    %509 = vmatpush1.msra.mxu0 %v283
    %510 = vmatprep.subr.mxu0 %v279
    %511 = vmatpush1.msra.mxu0 %v278
    %512 = vmatprep.subr.mxu0 %v274
    %513 = vmatpush1.msra.mxu0 %v273
    %514 = vmatprep.subr.mxu0 %v269
    %515 = vmatpush1.msra.mxu0 %v268
    %516 = vmatprep.subr.mxu0 %v264
    %517 = vmatpush1.msra.mxu0 %v263
    %518 = vmatprep.subr.mxu0 %v259
    %519 = vmatpush1.msra.mxu0 %v258
    %520 = vmatprep.subr.mxu0 %v254
    %521 = vmatpush1.msra.mxu0 %v253
    %522 = vmatprep.subr.mxu0 %v409
    %523 = vmatpush2.msra.mxu0 %v408
    %524 = vmatprep.subr.mxu0 %v404
    %525 = vmatpush2.msra.mxu0 %v403
    %526 = vmatprep.subr.mxu0 %v399
    %527 = vmatpush2.msra.mxu0 %v398
    %528 = vmatprep.subr.mxu0 %v394
    %529 = vmatpush2.msra.mxu0 %v393
    %530 = vmatprep.subr.mxu0 %v389
    %531 = vmatpush2.msra.mxu0 %v388
    %532 = vmatprep.subr.mxu0 %v384
    %533 = vmatpush2.msra.mxu0 %v383
    %534 = vmatprep.subr.mxu0 %v379
    %535 = vmatpush2.msra.mxu0 %v378
    %536 = vmatprep.subr.mxu0 %v374
    %537 = vmatpush2.msra.mxu0 %v373
    %538 = vmatprep.subr.mxu0 %v369
    %539 = vmatpush2.msra.mxu0 %v368
    %540 = vmatprep.subr.mxu0 %v364
    %541 = vmatpush2.msra.mxu0 %v363
    %542 = vmatprep.subr.mxu0 %v359
    %543 = vmatpush2.msra.mxu0 %v358
    %544 = vmatprep.subr.mxu0 %v354
    %545 = vmatpush2.msra.mxu0 %v353
    %546 = vmatprep.subr.mxu0 %v349
    %547 = vmatpush2.msra.mxu0 %v348
    %548 = vmatprep.subr.mxu0 %v344
    %549 = vmatpush2.msra.mxu0 %v343
    %550 = vmatprep.subr.mxu0 %v339
    %551 = vmatpush2.msra.mxu0 %v338
    %552 = vmatprep.subr.mxu0 %v334
    %553 = vmatpush2.msra.mxu0 %v333
    %554 = vmatprep.mubr.f32.mxu0 %v88
    %555 = vmatmul.mubr.f32.gmra.mxu0 %v87
    %v556 = vpop.f32.mrf.mxu0
    %v557 = vadd.f32 %v480, %v556
    %v558 = vpop.f32.mrf.mxu0
    %v559 = vadd.f32 %v482, %v558
    %560 = vmatprep.mubr.f32.mxu0 %v92
    %561 = vmatmul.mubr.f32.gmra.mxu0 %v91
    %v562 = vpop.f32.mrf.mxu0
    %v563 = vadd.f32 %v486, %v562
    %v564 = vpop.f32.mrf.mxu0
    %v565 = vadd.f32 %v488, %v564
    %566 = vdwg.mxu0
    %567 = vmatprep.subr.mxu0 %v171
    %568 = vmatpush1.msra.mxu0 %v170
    %569 = vmatprep.subr.mxu0 %v166
    %570 = vmatpush1.msra.mxu0 %v165
    %571 = vmatprep.subr.mxu0 %v161
    %572 = vmatpush1.msra.mxu0 %v160
    %573 = vmatprep.subr.mxu0 %v156
    %574 = vmatpush1.msra.mxu0 %v155
    %575 = vmatprep.subr.mxu0 %v151
    %576 = vmatpush1.msra.mxu0 %v150
    %577 = vmatprep.subr.mxu0 %v146
    %578 = vmatpush1.msra.mxu0 %v145
    %579 = vmatprep.subr.mxu0 %v141
    %580 = vmatpush1.msra.mxu0 %v140
    %581 = vmatprep.subr.mxu0 %v136
    %582 = vmatpush1.msra.mxu0 %v135
    %583 = vmatprep.subr.mxu0 %v131
    %584 = vmatpush1.msra.mxu0 %v130
    %585 = vmatprep.subr.mxu0 %v126
    %586 = vmatpush1.msra.mxu0 %v125
    %587 = vmatprep.subr.mxu0 %v121
    %588 = vmatpush1.msra.mxu0 %v120
    %589 = vmatprep.subr.mxu0 %v116
    %590 = vmatpush1.msra.mxu0 %v115
    %591 = vmatprep.subr.mxu0 %v111
    %592 = vmatpush1.msra.mxu0 %v110
    %593 = vmatprep.subr.mxu0 %v106
    %594 = vmatpush1.msra.mxu0 %v105
    %595 = vmatprep.subr.mxu0 %v101
    %596 = vmatpush1.msra.mxu0 %v100
    %597 = vmatprep.subr.mxu0 %v96
    %598 = vmatpush1.msra.mxu0 %v95
    %599 = vmatprep.subr.mxu0 %v251
    %600 = vmatpush2.msra.mxu0 %v250
    %601 = vmatprep.subr.mxu0 %v246
    %602 = vmatpush2.msra.mxu0 %v245
    %603 = vmatprep.subr.mxu0 %v241
    %604 = vmatpush2.msra.mxu0 %v240
    %605 = vmatprep.subr.mxu0 %v236
    %606 = vmatpush2.msra.mxu0 %v235
    %607 = vmatprep.subr.mxu0 %v231
    %608 = vmatpush2.msra.mxu0 %v230
    %609 = vmatprep.subr.mxu0 %v226
    %610 = vmatpush2.msra.mxu0 %v225
    %611 = vmatprep.subr.mxu0 %v221
    %612 = vmatpush2.msra.mxu0 %v220
    %613 = vmatprep.subr.mxu0 %v216
    %614 = vmatpush2.msra.mxu0 %v215
    %615 = vmatprep.subr.mxu0 %v211
    %616 = vmatpush2.msra.mxu0 %v210
    %617 = vmatprep.subr.mxu0 %v206
    %618 = vmatpush2.msra.mxu0 %v205
    %619 = vmatprep.subr.mxu0 %v201
    %620 = vmatpush2.msra.mxu0 %v200
    %621 = vmatprep.subr.mxu0 %v196
    %622 = vmatpush2.msra.mxu0 %v195
    %623 = vmatprep.subr.mxu0 %v191
    %624 = vmatpush2.msra.mxu0 %v190
    %625 = vmatprep.subr.mxu0 %v186
    %626 = vmatpush2.msra.mxu0 %v185
    %627 = vmatprep.subr.mxu0 %v181
    %628 = vmatpush2.msra.mxu0 %v180
    %629 = vmatprep.subr.mxu0 %v176
    %630 = vmatpush2.msra.mxu0 %v175
    %631 = vmatprep.mubr.f32.mxu0 %v86
    %632 = vmatmul.mubr.f32.gmra.mxu0 %v85
    %v633 = vpop.f32.mrf.mxu0
    %v634 = vadd.f32 0.0, %v633
    %v635 = vpop.f32.mrf.mxu0
    %v636 = vadd.f32 0.0, %v635
    %637 = vmatprep.mubr.f32.mxu0 %v90
    %638 = vmatmul.mubr.f32.gmra.mxu0 %v89
    %v639 = vpop.f32.mrf.mxu0
    %v640 = vadd.f32 0.0, %v639
    %v641 = vpop.f32.mrf.mxu0
    %v642 = vadd.f32 0.0, %v641
    %643 = vdwg.mxu0
    %644 = vmatprep.subr.mxu0 %v331
    %645 = vmatpush1.msra.mxu0 %v330
    %646 = vmatprep.subr.mxu0 %v326
    %647 = vmatpush1.msra.mxu0 %v325
    %648 = vmatprep.subr.mxu0 %v321
    %649 = vmatpush1.msra.mxu0 %v320
    %650 = vmatprep.subr.mxu0 %v316
    %651 = vmatpush1.msra.mxu0 %v315
    %652 = vmatprep.subr.mxu0 %v311
    %653 = vmatpush1.msra.mxu0 %v310
    %654 = vmatprep.subr.mxu0 %v306
    %655 = vmatpush1.msra.mxu0 %v305
    %656 = vmatprep.subr.mxu0 %v301
    %657 = vmatpush1.msra.mxu0 %v300
    %658 = vmatprep.subr.mxu0 %v296
    %659 = vmatpush1.msra.mxu0 %v295
    %660 = vmatprep.subr.mxu0 %v291
    %661 = vmatpush1.msra.mxu0 %v290
    %662 = vmatprep.subr.mxu0 %v286
    %663 = vmatpush1.msra.mxu0 %v285
    %664 = vmatprep.subr.mxu0 %v281
    %665 = vmatpush1.msra.mxu0 %v280
    %666 = vmatprep.subr.mxu0 %v276
    %667 = vmatpush1.msra.mxu0 %v275
    %668 = vmatprep.subr.mxu0 %v271
    %669 = vmatpush1.msra.mxu0 %v270
    %670 = vmatprep.subr.mxu0 %v266
    %671 = vmatpush1.msra.mxu0 %v265
    %672 = vmatprep.subr.mxu0 %v261
    %673 = vmatpush1.msra.mxu0 %v260
    %674 = vmatprep.subr.mxu0 %v256
    %675 = vmatpush1.msra.mxu0 %v255
    %676 = vmatprep.subr.mxu0 %v411
    %677 = vmatpush2.msra.mxu0 %v410
    %678 = vmatprep.subr.mxu0 %v406
    %679 = vmatpush2.msra.mxu0 %v405
    %680 = vmatprep.subr.mxu0 %v401
    %681 = vmatpush2.msra.mxu0 %v400
    %682 = vmatprep.subr.mxu0 %v396
    %683 = vmatpush2.msra.mxu0 %v395
    %684 = vmatprep.subr.mxu0 %v391
    %685 = vmatpush2.msra.mxu0 %v390
    %686 = vmatprep.subr.mxu0 %v386
    %687 = vmatpush2.msra.mxu0 %v385
    %688 = vmatprep.subr.mxu0 %v381
    %689 = vmatpush2.msra.mxu0 %v380
    %690 = vmatprep.subr.mxu0 %v376
    %691 = vmatpush2.msra.mxu0 %v375
    %692 = vmatprep.subr.mxu0 %v371
    %693 = vmatpush2.msra.mxu0 %v370
    %694 = vmatprep.subr.mxu0 %v366
    %695 = vmatpush2.msra.mxu0 %v365
    %696 = vmatprep.subr.mxu0 %v361
    %697 = vmatpush2.msra.mxu0 %v360
    %698 = vmatprep.subr.mxu0 %v356
    %699 = vmatpush2.msra.mxu0 %v355
    %700 = vmatprep.subr.mxu0 %v351
    %701 = vmatpush2.msra.mxu0 %v350
    %702 = vmatprep.subr.mxu0 %v346
    %703 = vmatpush2.msra.mxu0 %v345
    %704 = vmatprep.subr.mxu0 %v341
    %705 = vmatpush2.msra.mxu0 %v340
    %706 = vmatprep.subr.mxu0 %v336
    %707 = vmatpush2.msra.mxu0 %v335
    %708 = vmatprep.mubr.f32.mxu0 %v88
    %709 = vmatmul.mubr.f32.gmra.mxu0 %v87
    %v710 = vpop.f32.mrf.mxu0
    %v711 = vadd.f32 %v634, %v710
    %v712 = vpop.f32.mrf.mxu0
    %v713 = vadd.f32 %v636, %v712
    %714 = vmatprep.mubr.f32.mxu0 %v92
    %715 = vmatmul.mubr.f32.gmra.mxu0 %v91
    %v716 = vpop.f32.mrf.mxu0
    %v717 = vadd.f32 %v640, %v716
    %v718 = vpop.f32.mrf.mxu0
    %v719 = vadd.f32 %v642, %v718
    %720 = vdwg.mxu0
    %721 = vmatprep.subr.mxu0 0.0
    %722 = vmatpush1.msra.mxu0 %v172
    %723 = vmatprep.subr.mxu0 0.0
    %724 = vmatpush1.msra.mxu0 %v167
    %725 = vmatprep.subr.mxu0 0.0
    %726 = vmatpush1.msra.mxu0 %v162
    %727 = vmatprep.subr.mxu0 0.0
    %728 = vmatpush1.msra.mxu0 %v157
    %729 = vmatprep.subr.mxu0 0.0
    %730 = vmatpush1.msra.mxu0 %v152
    %731 = vmatprep.subr.mxu0 0.0
    %732 = vmatpush1.msra.mxu0 %v147
    %733 = vmatprep.subr.mxu0 0.0
    %734 = vmatpush1.msra.mxu0 %v142
    %735 = vmatprep.subr.mxu0 0.0
    %736 = vmatpush1.msra.mxu0 %v137
    %737 = vmatprep.subr.mxu0 0.0
    %738 = vmatpush1.msra.mxu0 %v132
    %739 = vmatprep.subr.mxu0 0.0
    %740 = vmatpush1.msra.mxu0 %v127
    %741 = vmatprep.subr.mxu0 0.0
    %742 = vmatpush1.msra.mxu0 %v122
    %743 = vmatprep.subr.mxu0 0.0
    %744 = vmatpush1.msra.mxu0 %v117
    %745 = vmatprep.subr.mxu0 0.0
    %746 = vmatpush1.msra.mxu0 %v112
    %747 = vmatprep.subr.mxu0 0.0
    %748 = vmatpush1.msra.mxu0 %v107
    %749 = vmatprep.subr.mxu0 0.0
    %750 = vmatpush1.msra.mxu0 %v102
    %751 = vmatprep.subr.mxu0 0.0
    %752 = vmatpush1.msra.mxu0 %v97
    %753 = vmatprep.subr.mxu0 0.0
    %754 = vmatpush2.msra.mxu0 %v252
    %755 = vmatprep.subr.mxu0 0.0
    %756 = vmatpush2.msra.mxu0 %v247
    %757 = vmatprep.subr.mxu0 0.0
    %758 = vmatpush2.msra.mxu0 %v242
    %759 = vmatprep.subr.mxu0 0.0
    %760 = vmatpush2.msra.mxu0 %v237
    %761 = vmatprep.subr.mxu0 0.0
    %762 = vmatpush2.msra.mxu0 %v232
    %763 = vmatprep.subr.mxu0 0.0
    %764 = vmatpush2.msra.mxu0 %v227
    %765 = vmatprep.subr.mxu0 0.0
    %766 = vmatpush2.msra.mxu0 %v222
    %767 = vmatprep.subr.mxu0 0.0
    %768 = vmatpush2.msra.mxu0 %v217
    %769 = vmatprep.subr.mxu0 0.0
    %770 = vmatpush2.msra.mxu0 %v212
    %771 = vmatprep.subr.mxu0 0.0
    %772 = vmatpush2.msra.mxu0 %v207
    %773 = vmatprep.subr.mxu0 0.0
    %774 = vmatpush2.msra.mxu0 %v202
    %775 = vmatprep.subr.mxu0 0.0
    %776 = vmatpush2.msra.mxu0 %v197
    %777 = vmatprep.subr.mxu0 0.0
    %778 = vmatpush2.msra.mxu0 %v192
    %779 = vmatprep.subr.mxu0 0.0
    %780 = vmatpush2.msra.mxu0 %v187
    %781 = vmatprep.subr.mxu0 0.0
    %782 = vmatpush2.msra.mxu0 %v182
    %783 = vmatprep.subr.mxu0 0.0
    %784 = vmatpush2.msra.mxu0 %v177
    %785 = vmatprep.mubr.f32.mxu0 %v86
    %786 = vmatmul.mubr.f32.gmra.mxu0 %v85
    %v787 = vpop.f32.mrf.mxu0
    %v788 = vadd.f32 0.0, %v787
    %v789 = vpop.f32.mrf.mxu0
    %790 = vmatprep.mubr.f32.mxu0 %v90
    %791 = vmatmul.mubr.f32.gmra.mxu0 %v89
    %v792 = vpop.f32.mrf.mxu0
    %v793 = vadd.f32 0.0, %v792
    %v794 = vpop.f32.mrf.mxu0
    %795 = vdwg.mxu0
    %796 = vmatprep.subr.mxu0 0.0
    %797 = vmatpush1.msra.mxu0 %v332
    %798 = vmatprep.subr.mxu0 0.0
    %799 = vmatpush1.msra.mxu0 %v327
    %800 = vmatprep.subr.mxu0 0.0
    %801 = vmatpush1.msra.mxu0 %v322
    %802 = vmatprep.subr.mxu0 0.0
    %803 = vmatpush1.msra.mxu0 %v317
    %804 = vmatprep.subr.mxu0 0.0
    %805 = vmatpush1.msra.mxu0 %v312
    %806 = vmatprep.subr.mxu0 0.0
    %807 = vmatpush1.msra.mxu0 %v307
    %808 = vmatprep.subr.mxu0 0.0
    %809 = vmatpush1.msra.mxu0 %v302
    %810 = vmatprep.subr.mxu0 0.0
    %811 = vmatpush1.msra.mxu0 %v297
    %812 = vmatprep.subr.mxu0 0.0
    %813 = vmatpush1.msra.mxu0 %v292
    %814 = vmatprep.subr.mxu0 0.0
    %815 = vmatpush1.msra.mxu0 %v287
    %816 = vmatprep.subr.mxu0 0.0
    %817 = vmatpush1.msra.mxu0 %v282
    %818 = vmatprep.subr.mxu0 0.0
    %819 = vmatpush1.msra.mxu0 %v277
    %820 = vmatprep.subr.mxu0 0.0
    %821 = vmatpush1.msra.mxu0 %v272
    %822 = vmatprep.subr.mxu0 0.0
    %823 = vmatpush1.msra.mxu0 %v267
    %824 = vmatprep.subr.mxu0 0.0
    %825 = vmatpush1.msra.mxu0 %v262
    %826 = vmatprep.subr.mxu0 0.0
    %827 = vmatpush1.msra.mxu0 %v257
    %828 = vmatprep.subr.mxu0 0.0
    %829 = vmatpush2.msra.mxu0 %v412
    %830 = vmatprep.subr.mxu0 0.0
    %831 = vmatpush2.msra.mxu0 %v407
    %832 = vmatprep.subr.mxu0 0.0
    %833 = vmatpush2.msra.mxu0 %v402
    %834 = vmatprep.subr.mxu0 0.0
    %835 = vmatpush2.msra.mxu0 %v397
    %836 = vmatprep.subr.mxu0 0.0
    %837 = vmatpush2.msra.mxu0 %v392
    %838 = vmatprep.subr.mxu0 0.0
    %839 = vmatpush2.msra.mxu0 %v387
    %840 = vmatprep.subr.mxu0 0.0
    %841 = vmatpush2.msra.mxu0 %v382
    %842 = vmatprep.subr.mxu0 0.0
    %843 = vmatpush2.msra.mxu0 %v377
    %844 = vmatprep.subr.mxu0 0.0
    %845 = vmatpush2.msra.mxu0 %v372
    %846 = vmatprep.subr.mxu0 0.0
    %847 = vmatpush2.msra.mxu0 %v367
    %848 = vmatprep.subr.mxu0 0.0
    %849 = vmatpush2.msra.mxu0 %v362
    %850 = vmatprep.subr.mxu0 0.0
    %851 = vmatpush2.msra.mxu0 %v357
    %852 = vmatprep.subr.mxu0 0.0
    %853 = vmatpush2.msra.mxu0 %v352
    %854 = vmatprep.subr.mxu0 0.0
    %855 = vmatpush2.msra.mxu0 %v347
    %856 = vmatprep.subr.mxu0 0.0
    %857 = vmatpush2.msra.mxu0 %v342
    %858 = vmatprep.subr.mxu0 0.0
    %859 = vmatpush2.msra.mxu0 %v337
    %860 = vmatprep.mubr.f32.mxu0 %v88
    %861 = vmatmul.mubr.f32.gmra.mxu0 %v87
    %v862 = vpop.f32.mrf.mxu0
    %v863 = vadd.f32 %v788, %v862
    %v864 = vpop.f32.mrf.mxu0
    %865 = vmatprep.mubr.f32.mxu0 %v92
    %866 = vmatmul.mubr.f32.gmra.mxu0 %v91
    %v867 = vpop.f32.mrf.mxu0
    %v868 = vadd.f32 %v793, %v867
    %v869 = vpop.f32.mrf.mxu0
    %870 = vdwg.mxu0
    %v871 = vld [vmem:[%s3] sm:$0xff]
    %v872 = vld [vmem:[%s3 + $0x8] sm:$0xff]
    %v873 = vld [vmem:[%s3 + $0x10] sm:$0xff]
    %v874 = vld [vmem:[%s3 + $0x18] sm:$0xff]
    %v875 = vld [vmem:[%s3 + $0x20] sm:$0xff]
    %v876 = vld [vmem:[%s3 + $0x28] sm:$0xff]
    %v877 = vld [vmem:[%s3 + $0x30] sm:$0xff]
    %v878 = vld [vmem:[%s3 + $0x38] sm:$0xff]
    %v879 = vld [vmem:[%s3 + $0x40] sm:$0xff]
    %v880 = vld [vmem:[%s3 + $0x48] sm:$0xff]
    %v881 = vld [vmem:[%s3 + $0x50] sm:$0xff]
    %v882 = vld [vmem:[%s3 + $0x58] sm:$0xff]
    %v883 = vld [vmem:[%s3 + $0x60] sm:$0xff]
    %v884 = vld [vmem:[%s3 + $0x68] sm:$0xff]
    %v885 = vld [vmem:[%s3 + $0x70] sm:$0xff]
    %v886 = vld [vmem:[%s3 + $0x78] sm:$0xff]
    %v887 = vld [vmem:[%s3 + $0x80] sm:$0xff]
    %v888 = vld [vmem:[%s3 + $0x88] sm:$0xff]
    %v889 = vld [vmem:[%s3 + $0x90] sm:$0xff]
    %v890 = vld [vmem:[%s3 + $0x98] sm:$0xff]
    %v891 = vld [vmem:[%s3 + $0xa0] sm:$0xff]
    %v892 = vld [vmem:[%s3 + $0xa8] sm:$0xff]
    %v893 = vld [vmem:[%s3 + $0xb0] sm:$0xff]
    %v894 = vld [vmem:[%s3 + $0xb8] sm:$0xff]
    %v895 = vld [vmem:[%s3 + $0xc0] sm:$0xff]
    %v896 = vld [vmem:[%s3 + $0xc8] sm:$0xff]
    %v897 = vld [vmem:[%s3 + $0xd0] sm:$0xff]
    %v898 = vld [vmem:[%s3 + $0xd8] sm:$0xff]
    %v899 = vld [vmem:[%s3 + $0xe0] sm:$0xff]
    %v900 = vld [vmem:[%s3 + $0xe8] sm:$0xff]
    %v901 = vld [vmem:[%s3 + $0xf0] sm:$0xff]
    %v902 = vld [vmem:[%s3 + $0xf8] sm:$0xff]
    %v903 = vld [vmem:[%s3 + $0x100] sm:$0xff]
    %v904 = vld [vmem:[%s3 + $0x108] sm:$0xff]
    %v905 = vld [vmem:[%s3 + $0x110] sm:$0xff]
    %v906 = vld [vmem:[%s3 + $0x118] sm:$0xff]
    %v907 = vld [vmem:[%s3 + $0x120] sm:$0xff]
    %v908 = vld [vmem:[%s3 + $0x128] sm:$0xff]
    %v909 = vld [vmem:[%s3 + $0x130] sm:$0xff]
    %v910 = vld [vmem:[%s3 + $0x138] sm:$0xff]
    %v911 = vld [vmem:[%s3 + $0x140] sm:$0xff]
    %v912 = vld [vmem:[%s3 + $0x148] sm:$0xff]
    %v913 = vld [vmem:[%s3 + $0x150] sm:$0xff]
    %v914 = vld [vmem:[%s3 + $0x158] sm:$0xff]
    %v915 = vld [vmem:[%s3 + $0x160] sm:$0xff]
    %v916 = vld [vmem:[%s3 + $0x168] sm:$0xff]
    %v917 = vld [vmem:[%s3 + $0x170] sm:$0xff]
    %v918 = vld [vmem:[%s3 + $0x178] sm:$0xff]
    %v919 = vld [vmem:[%s3 + $0x180] sm:$0xff]
    %v920 = vld [vmem:[%s3 + $0x188] sm:$0xff]
    %v921 = vld [vmem:[%s3 + $0x190] sm:$0xff]
    %v922 = vld [vmem:[%s3 + $0x198] sm:$0xff]
    %v923 = vld [vmem:[%s3 + $0x1a0] sm:$0xff]
    %v924 = vld [vmem:[%s3 + $0x1a8] sm:$0xff]
    %v925 = vld [vmem:[%s3 + $0x1b0] sm:$0xff]
    %v926 = vld [vmem:[%s3 + $0x1b8] sm:$0xff]
    %v927 = vld [vmem:[%s3 + $0x1c0] sm:$0xff]
    %v928 = vld [vmem:[%s3 + $0x1c8] sm:$0xff]
    %v929 = vld [vmem:[%s3 + $0x1d0] sm:$0xff]
    %v930 = vld [vmem:[%s3 + $0x1d8] sm:$0xff]
    %v931 = vld [vmem:[%s3 + $0x1e0] sm:$0xff]
    %v932 = vld [vmem:[%s3 + $0x1e8] sm:$0xff]
    %v933 = vld [vmem:[%s3 + $0x1f0] sm:$0xff]
    %v934 = vld [vmem:[%s3 + $0x1f8] sm:$0xff]
    %v935 = vld [vmem:[%s3 + $0x200] sm:$0xff]
    %v936 = vld [vmem:[%s3 + $0x208] sm:$0xff]
    %v937 = vld [vmem:[%s3 + $0x210] sm:$0xff]
    %v938 = vld [vmem:[%s3 + $0x218] sm:$0xff]
    %v939 = vld [vmem:[%s3 + $0x220] sm:$0xff]
    %v940 = vld [vmem:[%s3 + $0x228] sm:$0xff]
    %v941 = vld [vmem:[%s3 + $0x230] sm:$0xff]
    %v942 = vld [vmem:[%s3 + $0x238] sm:$0xff]
    %v943 = vld [vmem:[%s3 + $0x240] sm:$0xff]
    %v944 = vld [vmem:[%s3 + $0x248] sm:$0xff]
    %v945 = vld [vmem:[%s3 + $0x250] sm:$0xff]
    %v946 = vld [vmem:[%s3 + $0x258] sm:$0xff]
    %v947 = vld [vmem:[%s3 + $0x260] sm:$0xff]
    %v948 = vld [vmem:[%s3 + $0x268] sm:$0xff]
    %v949 = vld [vmem:[%s3 + $0x270] sm:$0xff]
    %v950 = vld [vmem:[%s3 + $0x278] sm:$0xff]
    %v951 = vld [vmem:[%s3 + $0x280] sm:$0xff]
    %v952 = vld [vmem:[%s3 + $0x288] sm:$0xff]
    %v953 = vld [vmem:[%s3 + $0x290] sm:$0xff]
    %v954 = vld [vmem:[%s3 + $0x298] sm:$0xff]
    %v955 = vld [vmem:[%s3 + $0x2a0] sm:$0xff]
    %v956 = vld [vmem:[%s3 + $0x2a8] sm:$0xff]
    %v957 = vld [vmem:[%s3 + $0x2b0] sm:$0xff]
    %v958 = vld [vmem:[%s3 + $0x2b8] sm:$0xff]
    %v959 = vld [vmem:[%s3 + $0x2c0] sm:$0xff]
    %v960 = vld [vmem:[%s3 + $0x2c8] sm:$0xff]
    %v961 = vld [vmem:[%s3 + $0x2d0] sm:$0xff]
    %v962 = vld [vmem:[%s3 + $0x2d8] sm:$0xff]
    %v963 = vld [vmem:[%s3 + $0x2e0] sm:$0xff]
    %v964 = vld [vmem:[%s3 + $0x2e8] sm:$0xff]
    %v965 = vld [vmem:[%s3 + $0x2f0] sm:$0xff]
    %v966 = vld [vmem:[%s3 + $0x2f8] sm:$0xff]
    %v967 = vld [vmem:[%s3 + $0x300] sm:$0xff]
    %v968 = vld [vmem:[%s3 + $0x308] sm:$0xff]
    %v969 = vld [vmem:[%s3 + $0x310] sm:$0xff]
    %v970 = vld [vmem:[%s3 + $0x318] sm:$0xff]
    %v971 = vld [vmem:[%s3 + $0x320] sm:$0xff]
    %v972 = vld [vmem:[%s3 + $0x328] sm:$0xff]
    %v973 = vld [vmem:[%s3 + $0x330] sm:$0xff]
    %v974 = vld [vmem:[%s3 + $0x338] sm:$0xff]
    %v975 = vld [vmem:[%s3 + $0x340] sm:$0xff]
    %v976 = vld [vmem:[%s3 + $0x348] sm:$0xff]
    %v977 = vld [vmem:[%s3 + $0x350] sm:$0xff]
    %v978 = vld [vmem:[%s3 + $0x358] sm:$0xff]
    %v979 = vld [vmem:[%s3 + $0x360] sm:$0xff]
    %v980 = vld [vmem:[%s3 + $0x368] sm:$0xff]
    %v981 = vld [vmem:[%s3 + $0x370] sm:$0xff]
    %v982 = vld [vmem:[%s3 + $0x378] sm:$0xff]
    %v983 = vld [vmem:[%s3 + $0x380] sm:$0xff]
    %v984 = vld [vmem:[%s3 + $0x388] sm:$0xff]
    %v985 = vld [vmem:[%s3 + $0x390] sm:$0xff]
    %v986 = vld [vmem:[%s3 + $0x398] sm:$0xff]
    %v987 = vld [vmem:[%s3 + $0x3a0] sm:$0xff]
    %v988 = vld [vmem:[%s3 + $0x3a8] sm:$0xff]
    %v989 = vld [vmem:[%s3 + $0x3b0] sm:$0xff]
    %v990 = vld [vmem:[%s3 + $0x3b8] sm:$0xff]
    %v991 = vld [vmem:[%s3 + $0x3c0] sm:$0xff]
    %v992 = vld [vmem:[%s3 + $0x3c8] sm:$0xff]
    %v993 = vld [vmem:[%s3 + $0x3d0] sm:$0xff]
    %v994 = vld [vmem:[%s3 + $0x3d8] sm:$0xff]
    %v995 = vld [vmem:[%s3 + $0x3e0] sm:$0xff]
    %v996 = vld [vmem:[%s3 + $0x3e8] sm:$0xff]
    %v997 = vld [vmem:[%s3 + $0x3f0] sm:$0xff]
    %v998 = vld [vmem:[%s3 + $0x3f8] sm:$0xff]
    %v999 = vld [vmem:[%s3 + $0x400] sm:$0xff]
    %v1000 = vld [vmem:[%s3 + $0x408] sm:$0xff]
    %v1001 = vld [vmem:[%s3 + $0x410] sm:$0xff]
    %v1002 = vld [vmem:[%s3 + $0x418] sm:$0xff]
    %v1003 = vld [vmem:[%s3 + $0x420] sm:$0xff]
    %v1004 = vld [vmem:[%s3 + $0x428] sm:$0xff]
    %v1005 = vld [vmem:[%s3 + $0x430] sm:$0xff]
    %v1006 = vld [vmem:[%s3 + $0x438] sm:$0xff]
    %v1007 = vld [vmem:[%s3 + $0x440] sm:$0xff]
    %v1008 = vld [vmem:[%s3 + $0x448] sm:$0xff]
    %v1009 = vld [vmem:[%s3 + $0x450] sm:$0xff]
    %v1010 = vld [vmem:[%s3 + $0x458] sm:$0xff]
    %v1011 = vld [vmem:[%s3 + $0x460] sm:$0xff]
    %v1012 = vld [vmem:[%s3 + $0x468] sm:$0xff]
    %v1013 = vld [vmem:[%s3 + $0x470] sm:$0xff]
    %v1014 = vld [vmem:[%s3 + $0x478] sm:$0xff]
    %v1015 = vld [vmem:[%s3 + $0x480] sm:$0xff]
    %v1016 = vld [vmem:[%s3 + $0x488] sm:$0xff]
    %v1017 = vld [vmem:[%s3 + $0x490] sm:$0xff]
    %v1018 = vld [vmem:[%s3 + $0x498] sm:$0xff]
    %v1019 = vld [vmem:[%s3 + $0x4a0] sm:$0xff]
    %v1020 = vld [vmem:[%s3 + $0x4a8] sm:$0xff]
    %v1021 = vld [vmem:[%s3 + $0x4b0] sm:$0xff]
    %v1022 = vld [vmem:[%s3 + $0x4b8] sm:$0xff]
    %v1023 = vld [vmem:[%s3 + $0x4c0] sm:$0xff]
    %v1024 = vld [vmem:[%s3 + $0x4c8] sm:$0xff]
    %v1025 = vld [vmem:[%s3 + $0x4d0] sm:$0xff]
    %v1026 = vld [vmem:[%s3 + $0x4d8] sm:$0xff]
    %v1027 = vld [vmem:[%s3 + $0x4e0] sm:$0xff]
    %v1028 = vld [vmem:[%s3 + $0x4e8] sm:$0xff]
    %v1029 = vld [vmem:[%s3 + $0x4f0] sm:$0xff]
    %v1030 = vld [vmem:[%s3 + $0x4f8] sm:$0xff]
    %v1031 = vld [vmem:[%s3 + $0x500] sm:$0xff]
    %v1032 = vld [vmem:[%s3 + $0x508] sm:$0xff]
    %v1033 = vld [vmem:[%s3 + $0x510] sm:$0xff]
    %v1034 = vld [vmem:[%s3 + $0x518] sm:$0xff]
    %v1035 = vld [vmem:[%s3 + $0x520] sm:$0xff]
    %v1036 = vld [vmem:[%s3 + $0x528] sm:$0xff]
    %v1037 = vld [vmem:[%s3 + $0x530] sm:$0xff]
    %v1038 = vld [vmem:[%s3 + $0x538] sm:$0xff]
    %v1039 = vld [vmem:[%s3 + $0x540] sm:$0xff]
    %v1040 = vld [vmem:[%s3 + $0x548] sm:$0xff]
    %v1041 = vld [vmem:[%s3 + $0x550] sm:$0xff]
    %v1042 = vld [vmem:[%s3 + $0x558] sm:$0xff]
    %v1043 = vld [vmem:[%s3 + $0x560] sm:$0xff]
    %v1044 = vld [vmem:[%s3 + $0x568] sm:$0xff]
    %v1045 = vld [vmem:[%s3 + $0x570] sm:$0xff]
    %v1046 = vld [vmem:[%s3 + $0x578] sm:$0xff]
    %v1047 = vld [vmem:[%s3 + $0x580] sm:$0xff]
    %v1048 = vld [vmem:[%s3 + $0x588] sm:$0xff]
    %v1049 = vld [vmem:[%s3 + $0x590] sm:$0xff]
    %v1050 = vld [vmem:[%s3 + $0x598] sm:$0xff]
    %v1051 = vld [vmem:[%s3 + $0x5a0] sm:$0xff]
    %v1052 = vld [vmem:[%s3 + $0x5a8] sm:$0xff]
    %v1053 = vld [vmem:[%s3 + $0x5b0] sm:$0xff]
    %v1054 = vld [vmem:[%s3 + $0x5b8] sm:$0xff]
    %v1055 = vld [vmem:[%s3 + $0x5c0] sm:$0xff]
    %v1056 = vld [vmem:[%s3 + $0x5c8] sm:$0xff]
    %v1057 = vld [vmem:[%s3 + $0x5d0] sm:$0xff]
    %v1058 = vld [vmem:[%s3 + $0x5d8] sm:$0xff]
    %v1059 = vld [vmem:[%s3 + $0x5e0] sm:$0xff]
    %v1060 = vld [vmem:[%s3 + $0x5e8] sm:$0xff]
    %v1061 = vld [vmem:[%s3 + $0x5f0] sm:$0xff]
    %v1062 = vld [vmem:[%s3 + $0x5f8] sm:$0xff]
    %v1063 = vld [vmem:[%s3 + $0x600] sm:$0xff]
    %v1064 = vld [vmem:[%s3 + $0x608] sm:$0xff]
    %v1065 = vld [vmem:[%s3 + $0x610] sm:$0xff]
    %v1066 = vld [vmem:[%s3 + $0x618] sm:$0xff]
    %v1067 = vld [vmem:[%s3 + $0x620] sm:$0xff]
    %v1068 = vld [vmem:[%s3 + $0x628] sm:$0xff]
    %v1069 = vld [vmem:[%s3 + $0x630] sm:$0xff]
    %v1070 = vld [vmem:[%s3 + $0x638] sm:$0xff]
    %v1071 = vld [vmem:[%s3 + $0x640] sm:$0xff]
    %v1072 = vld [vmem:[%s3 + $0x648] sm:$0xff]
    %v1073 = vld [vmem:[%s3 + $0x650] sm:$0xff]
    %v1074 = vld [vmem:[%s3 + $0x658] sm:$0xff]
    %v1075 = vld [vmem:[%s3 + $0x660] sm:$0xff]
    %v1076 = vld [vmem:[%s3 + $0x668] sm:$0xff]
    %v1077 = vld [vmem:[%s3 + $0x670] sm:$0xff]
    %v1078 = vld [vmem:[%s3 + $0x678] sm:$0xff]
    %v1079 = vld [vmem:[%s3 + $0x680] sm:$0xff]
    %v1080 = vld [vmem:[%s3 + $0x688] sm:$0xff]
    %v1081 = vld [vmem:[%s3 + $0x690] sm:$0xff]
    %v1082 = vld [vmem:[%s3 + $0x698] sm:$0xff]
    %v1083 = vld [vmem:[%s3 + $0x6a0] sm:$0xff]
    %v1084 = vld [vmem:[%s3 + $0x6a8] sm:$0xff]
    %v1085 = vld [vmem:[%s3 + $0x6b0] sm:$0xff]
    %v1086 = vld [vmem:[%s3 + $0x6b8] sm:$0xff]
    %v1087 = vld [vmem:[%s3 + $0x6c0] sm:$0xff]
    %v1088 = vld [vmem:[%s3 + $0x6c8] sm:$0xff]
    %v1089 = vld [vmem:[%s3 + $0x6d0] sm:$0xff]
    %v1090 = vld [vmem:[%s3 + $0x6d8] sm:$0xff]
    %v1091 = vld [vmem:[%s3 + $0x6e0] sm:$0xff]
    %v1092 = vld [vmem:[%s3 + $0x6e8] sm:$0xff]
    %v1093 = vld [vmem:[%s3 + $0x6f0] sm:$0xff]
    %v1094 = vld [vmem:[%s3 + $0x6f8] sm:$0xff]
    %v1095 = vld [vmem:[%s3 + $0x700] sm:$0xff]
    %v1096 = vld [vmem:[%s3 + $0x708] sm:$0xff]
    %v1097 = vld [vmem:[%s3 + $0x710] sm:$0xff]
    %v1098 = vld [vmem:[%s3 + $0x718] sm:$0xff]
    %v1099 = vld [vmem:[%s3 + $0x720] sm:$0xff]
    %v1100 = vld [vmem:[%s3 + $0x728] sm:$0xff]
    %v1101 = vld [vmem:[%s3 + $0x730] sm:$0xff]
    %v1102 = vld [vmem:[%s3 + $0x738] sm:$0xff]
    %v1103 = vld [vmem:[%s3 + $0x740] sm:$0xff]
    %v1104 = vld [vmem:[%s3 + $0x748] sm:$0xff]
    %v1105 = vld [vmem:[%s3 + $0x750] sm:$0xff]
    %v1106 = vld [vmem:[%s3 + $0x758] sm:$0xff]
    %v1107 = vld [vmem:[%s3 + $0x760] sm:$0xff]
    %v1108 = vld [vmem:[%s3 + $0x768] sm:$0xff]
    %v1109 = vld [vmem:[%s3 + $0x770] sm:$0xff]
    %v1110 = vld [vmem:[%s3 + $0x778] sm:$0xff]
    %v1111 = vld [vmem:[%s3 + $0x780] sm:$0xff]
    %v1112 = vld [vmem:[%s3 + $0x788] sm:$0xff]
    %v1113 = vld [vmem:[%s3 + $0x790] sm:$0xff]
    %v1114 = vld [vmem:[%s3 + $0x798] sm:$0xff]
    %v1115 = vld [vmem:[%s3 + $0x7a0] sm:$0xff]
    %v1116 = vld [vmem:[%s3 + $0x7a8] sm:$0xff]
    %v1117 = vld [vmem:[%s3 + $0x7b0] sm:$0xff]
    %v1118 = vld [vmem:[%s3 + $0x7b8] sm:$0xff]
    %v1119 = vld [vmem:[%s3 + $0x7c0] sm:$0xff]
    %v1120 = vld [vmem:[%s3 + $0x7c8] sm:$0xff]
    %v1121 = vld [vmem:[%s3 + $0x7d0] sm:$0xff]
    %v1122 = vld [vmem:[%s3 + $0x7d8] sm:$0xff]
    %v1123 = vld [vmem:[%s3 + $0x7e0] sm:$0xff]
    %v1124 = vld [vmem:[%s3 + $0x7e8] sm:$0xff]
    %v1125 = vld [vmem:[%s3 + $0x7f0] sm:$0xff]
    %v1126 = vld [vmem:[%s3 + $0x7f8] sm:$0xff]
    %v1127 = vld [vmem:[%s3 + $0x800] sm:$0xff]
    %v1128 = vld [vmem:[%s3 + $0x808] sm:$0xff]
    %v1129 = vld [vmem:[%s3 + $0x810] sm:$0xff]
    %v1130 = vld [vmem:[%s3 + $0x818] sm:$0xff]
    %v1131 = vld [vmem:[%s3 + $0x820] sm:$0xff]
    %v1132 = vld [vmem:[%s3 + $0x828] sm:$0xff]
    %v1133 = vld [vmem:[%s3 + $0x830] sm:$0xff]
    %v1134 = vld [vmem:[%s3 + $0x838] sm:$0xff]
    %v1135 = vld [vmem:[%s3 + $0x840] sm:$0xff]
    %v1136 = vld [vmem:[%s3 + $0x848] sm:$0xff]
    %v1137 = vld [vmem:[%s3 + $0x850] sm:$0xff]
    %v1138 = vld [vmem:[%s3 + $0x858] sm:$0xff]
    %v1139 = vld [vmem:[%s3 + $0x860] sm:$0xff]
    %v1140 = vld [vmem:[%s3 + $0x868] sm:$0xff]
    %v1141 = vld [vmem:[%s3 + $0x870] sm:$0xff]
    %v1142 = vld [vmem:[%s3 + $0x878] sm:$0xff]
    %v1143 = vld [vmem:[%s3 + $0x880] sm:$0xff]
    %v1144 = vld [vmem:[%s3 + $0x888] sm:$0xff]
    %v1145 = vld [vmem:[%s3 + $0x890] sm:$0xff]
    %v1146 = vld [vmem:[%s3 + $0x898] sm:$0xff]
    %v1147 = vld [vmem:[%s3 + $0x8a0] sm:$0xff]
    %v1148 = vld [vmem:[%s3 + $0x8a8] sm:$0xff]
    %v1149 = vld [vmem:[%s3 + $0x8b0] sm:$0xff]
    %v1150 = vld [vmem:[%s3 + $0x8b8] sm:$0xff]
    %v1151 = vld [vmem:[%s3 + $0x8c0] sm:$0xff]
    %v1152 = vld [vmem:[%s3 + $0x8c8] sm:$0xff]
    %v1153 = vld [vmem:[%s3 + $0x8d0] sm:$0xff]
    %v1154 = vld [vmem:[%s3 + $0x8d8] sm:$0xff]
    %v1155 = vld [vmem:[%s3 + $0x8e0] sm:$0xff]
    %v1156 = vld [vmem:[%s3 + $0x8e8] sm:$0xff]
    %v1157 = vld [vmem:[%s3 + $0x8f0] sm:$0xff]
    %v1158 = vld [vmem:[%s3 + $0x8f8] sm:$0xff]
    %v1159 = vld [vmem:[%s3 + $0x900] sm:$0xff]
    %v1160 = vld [vmem:[%s3 + $0x908] sm:$0xff]
    %v1161 = vld [vmem:[%s3 + $0x910] sm:$0xff]
    %v1162 = vld [vmem:[%s3 + $0x918] sm:$0xff]
    %v1163 = vld [vmem:[%s3 + $0x920] sm:$0xff]
    %v1164 = vld [vmem:[%s3 + $0x928] sm:$0xff]
    %v1165 = vld [vmem:[%s3 + $0x930] sm:$0xff]
    %v1166 = vld [vmem:[%s3 + $0x938] sm:$0xff]
    %v1167 = vld [vmem:[%s3 + $0x940] sm:$0xff]
    %v1168 = vld [vmem:[%s3 + $0x948] sm:$0xff]
    %v1169 = vld [vmem:[%s3 + $0x950] sm:$0xff]
    %v1170 = vld [vmem:[%s3 + $0x958] sm:$0xff]
    %v1171 = vld [vmem:[%s3 + $0x960] sm:$0xff]
    %v1172 = vld [vmem:[%s3 + $0x968] sm:$0xff]
    %v1173 = vld [vmem:[%s3 + $0x970] sm:$0xff]
    %v1174 = vld [vmem:[%s3 + $0x978] sm:$0xff]
    %v1175 = vld [vmem:[%s3 + $0x980] sm:$0xff]
    %v1176 = vld [vmem:[%s3 + $0x988] sm:$0xff]
    %v1177 = vld [vmem:[%s3 + $0x990] sm:$0xff]
    %v1178 = vld [vmem:[%s3 + $0x998] sm:$0xff]
    %v1179 = vld [vmem:[%s3 + $0x9a0] sm:$0xff]
    %v1180 = vld [vmem:[%s3 + $0x9a8] sm:$0xff]
    %v1181 = vld [vmem:[%s3 + $0x9b0] sm:$0xff]
    %v1182 = vld [vmem:[%s3 + $0x9b8] sm:$0xff]
    %v1183 = vld [vmem:[%s3 + $0x9c0] sm:$0xff]
    %v1184 = vld [vmem:[%s3 + $0x9c8] sm:$0xff]
    %v1185 = vld [vmem:[%s3 + $0x9d0] sm:$0xff]
    %v1186 = vld [vmem:[%s3 + $0x9d8] sm:$0xff]
    %v1187 = vld [vmem:[%s3 + $0x9e0] sm:$0xff]
    %v1188 = vld [vmem:[%s3 + $0x9e8] sm:$0xff]
    %v1189 = vld [vmem:[%s3 + $0x9f0] sm:$0xff]
    %v1190 = vld [vmem:[%s3 + $0x9f8] sm:$0xff]
    %1191 = vmatprep.subr.mxu0 %v947
    %1192 = vmatpush1.msra.mxu0 %v946
    %1193 = vmatprep.subr.mxu0 %v942
    %1194 = vmatpush1.msra.mxu0 %v941
    %1195 = vmatprep.subr.mxu0 %v937
    %1196 = vmatpush1.msra.mxu0 %v936
    %1197 = vmatprep.subr.mxu0 %v932
    %1198 = vmatpush1.msra.mxu0 %v931
    %1199 = vmatprep.subr.mxu0 %v927
    %1200 = vmatpush1.msra.mxu0 %v926
    %1201 = vmatprep.subr.mxu0 %v922
    %1202 = vmatpush1.msra.mxu0 %v921
    %1203 = vmatprep.subr.mxu0 %v917
    %1204 = vmatpush1.msra.mxu0 %v916
    %1205 = vmatprep.subr.mxu0 %v912
    %1206 = vmatpush1.msra.mxu0 %v911
    %1207 = vmatprep.subr.mxu0 %v907
    %1208 = vmatpush1.msra.mxu0 %v906
    %1209 = vmatprep.subr.mxu0 %v902
    %1210 = vmatpush1.msra.mxu0 %v901
    %1211 = vmatprep.subr.mxu0 %v897
    %1212 = vmatpush1.msra.mxu0 %v896
    %1213 = vmatprep.subr.mxu0 %v892
    %1214 = vmatpush1.msra.mxu0 %v891
    %1215 = vmatprep.subr.mxu0 %v887
    %1216 = vmatpush1.msra.mxu0 %v886
    %1217 = vmatprep.subr.mxu0 %v882
    %1218 = vmatpush1.msra.mxu0 %v881
    %1219 = vmatprep.subr.mxu0 %v877
    %1220 = vmatpush1.msra.mxu0 %v876
    %1221 = vmatprep.subr.mxu0 %v872
    %1222 = vmatpush1.msra.mxu0 %v871
    %1223 = vmatprep.subr.mxu0 %v1027
    %1224 = vmatpush2.msra.mxu0 %v1026
    %1225 = vmatprep.subr.mxu0 %v1022
    %1226 = vmatpush2.msra.mxu0 %v1021
    %1227 = vmatprep.subr.mxu0 %v1017
    %1228 = vmatpush2.msra.mxu0 %v1016
    %1229 = vmatprep.subr.mxu0 %v1012
    %1230 = vmatpush2.msra.mxu0 %v1011
    %1231 = vmatprep.subr.mxu0 %v1007
    %1232 = vmatpush2.msra.mxu0 %v1006
    %1233 = vmatprep.subr.mxu0 %v1002
    %1234 = vmatpush2.msra.mxu0 %v1001
    %1235 = vmatprep.subr.mxu0 %v997
    %1236 = vmatpush2.msra.mxu0 %v996
    %1237 = vmatprep.subr.mxu0 %v992
    %1238 = vmatpush2.msra.mxu0 %v991
    %1239 = vmatprep.subr.mxu0 %v987
    %1240 = vmatpush2.msra.mxu0 %v986
    %1241 = vmatprep.subr.mxu0 %v982
    %1242 = vmatpush2.msra.mxu0 %v981
    %1243 = vmatprep.subr.mxu0 %v977
    %1244 = vmatpush2.msra.mxu0 %v976
    %1245 = vmatprep.subr.mxu0 %v972
    %1246 = vmatpush2.msra.mxu0 %v971
    %1247 = vmatprep.subr.mxu0 %v967
    %1248 = vmatpush2.msra.mxu0 %v966
    %1249 = vmatprep.subr.mxu0 %v962
    %1250 = vmatpush2.msra.mxu0 %v961
    %1251 = vmatprep.subr.mxu0 %v957
    %1252 = vmatpush2.msra.mxu0 %v956
    %1253 = vmatprep.subr.mxu0 %v952
    %1254 = vmatpush2.msra.mxu0 %v951
    %1255 = vmatprep.mubr.f32.mxu0 %v86
    %1256 = vmatmul.mubr.f32.gmra.mxu0 %v85
    %v1257 = vpop.f32.mrf.mxu0
    %v1258 = vadd.f32 0.0, %v1257
    %v1259 = vpop.f32.mrf.mxu0
    %v1260 = vadd.f32 0.0, %v1259
    %1261 = vmatprep.mubr.f32.mxu0 %v90
    %1262 = vmatmul.mubr.f32.gmra.mxu0 %v89
    %v1263 = vpop.f32.mrf.mxu0
    %v1264 = vadd.f32 0.0, %v1263
    %v1265 = vpop.f32.mrf.mxu0
    %v1266 = vadd.f32 0.0, %v1265
    %1267 = vdwg.mxu0
    %1268 = vmatprep.subr.mxu0 %v1107
    %1269 = vmatpush1.msra.mxu0 %v1106
    %1270 = vmatprep.subr.mxu0 %v1102
    %1271 = vmatpush1.msra.mxu0 %v1101
    %1272 = vmatprep.subr.mxu0 %v1097
    %1273 = vmatpush1.msra.mxu0 %v1096
    %1274 = vmatprep.subr.mxu0 %v1092
    %1275 = vmatpush1.msra.mxu0 %v1091
    %1276 = vmatprep.subr.mxu0 %v1087
    %1277 = vmatpush1.msra.mxu0 %v1086
    %1278 = vmatprep.subr.mxu0 %v1082
    %1279 = vmatpush1.msra.mxu0 %v1081
    %1280 = vmatprep.subr.mxu0 %v1077
    %1281 = vmatpush1.msra.mxu0 %v1076
    %1282 = vmatprep.subr.mxu0 %v1072
    %1283 = vmatpush1.msra.mxu0 %v1071
    %1284 = vmatprep.subr.mxu0 %v1067
    %1285 = vmatpush1.msra.mxu0 %v1066
    %1286 = vmatprep.subr.mxu0 %v1062
    %1287 = vmatpush1.msra.mxu0 %v1061
    %1288 = vmatprep.subr.mxu0 %v1057
    %1289 = vmatpush1.msra.mxu0 %v1056
    %1290 = vmatprep.subr.mxu0 %v1052
    %1291 = vmatpush1.msra.mxu0 %v1051
    %1292 = vmatprep.subr.mxu0 %v1047
    %1293 = vmatpush1.msra.mxu0 %v1046
    %1294 = vmatprep.subr.mxu0 %v1042
    %1295 = vmatpush1.msra.mxu0 %v1041
    %1296 = vmatprep.subr.mxu0 %v1037
    %1297 = vmatpush1.msra.mxu0 %v1036
    %1298 = vmatprep.subr.mxu0 %v1032
    %1299 = vmatpush1.msra.mxu0 %v1031
    %1300 = vmatprep.subr.mxu0 %v1187
    %1301 = vmatpush2.msra.mxu0 %v1186
    %1302 = vmatprep.subr.mxu0 %v1182
    %1303 = vmatpush2.msra.mxu0 %v1181
    %1304 = vmatprep.subr.mxu0 %v1177
    %1305 = vmatpush2.msra.mxu0 %v1176
    %1306 = vmatprep.subr.mxu0 %v1172
    %1307 = vmatpush2.msra.mxu0 %v1171
    %1308 = vmatprep.subr.mxu0 %v1167
    %1309 = vmatpush2.msra.mxu0 %v1166
    %1310 = vmatprep.subr.mxu0 %v1162
    %1311 = vmatpush2.msra.mxu0 %v1161
    %1312 = vmatprep.subr.mxu0 %v1157
    %1313 = vmatpush2.msra.mxu0 %v1156
    %1314 = vmatprep.subr.mxu0 %v1152
    %1315 = vmatpush2.msra.mxu0 %v1151
    %1316 = vmatprep.subr.mxu0 %v1147
    %1317 = vmatpush2.msra.mxu0 %v1146
    %1318 = vmatprep.subr.mxu0 %v1142
    %1319 = vmatpush2.msra.mxu0 %v1141
    %1320 = vmatprep.subr.mxu0 %v1137
    %1321 = vmatpush2.msra.mxu0 %v1136
    %1322 = vmatprep.subr.mxu0 %v1132
    %1323 = vmatpush2.msra.mxu0 %v1131
    %1324 = vmatprep.subr.mxu0 %v1127
    %1325 = vmatpush2.msra.mxu0 %v1126
    %1326 = vmatprep.subr.mxu0 %v1122
    %1327 = vmatpush2.msra.mxu0 %v1121
    %1328 = vmatprep.subr.mxu0 %v1117
    %1329 = vmatpush2.msra.mxu0 %v1116
    %1330 = vmatprep.subr.mxu0 %v1112
    %1331 = vmatpush2.msra.mxu0 %v1111
    %1332 = vmatprep.mubr.f32.mxu0 %v88
    %1333 = vmatmul.mubr.f32.gmra.mxu0 %v87
    %v1334 = vpop.f32.mrf.mxu0
    %v1335 = vadd.f32 %v1258, %v1334
    %v1336 = vpop.f32.mrf.mxu0
    %v1337 = vadd.f32 %v1260, %v1336
    %1338 = vmatprep.mubr.f32.mxu0 %v92
    %1339 = vmatmul.mubr.f32.gmra.mxu0 %v91
    %v1340 = vpop.f32.mrf.mxu0
    %v1341 = vadd.f32 %v1264, %v1340
    %v1342 = vpop.f32.mrf.mxu0
    %v1343 = vadd.f32 %v1266, %v1342
    %1344 = vdwg.mxu0
    %1345 = vmatprep.subr.mxu0 %v949
    %1346 = vmatpush1.msra.mxu0 %v948
    %1347 = vmatprep.subr.mxu0 %v944
    %1348 = vmatpush1.msra.mxu0 %v943
    %1349 = vmatprep.subr.mxu0 %v939
    %1350 = vmatpush1.msra.mxu0 %v938
    %1351 = vmatprep.subr.mxu0 %v934
    %1352 = vmatpush1.msra.mxu0 %v933
    %1353 = vmatprep.subr.mxu0 %v929
    %1354 = vmatpush1.msra.mxu0 %v928
    %1355 = vmatprep.subr.mxu0 %v924
    %1356 = vmatpush1.msra.mxu0 %v923
    %1357 = vmatprep.subr.mxu0 %v919
    %1358 = vmatpush1.msra.mxu0 %v918
    %1359 = vmatprep.subr.mxu0 %v914
    %1360 = vmatpush1.msra.mxu0 %v913
    %1361 = vmatprep.subr.mxu0 %v909
    %1362 = vmatpush1.msra.mxu0 %v908
    %1363 = vmatprep.subr.mxu0 %v904
    %1364 = vmatpush1.msra.mxu0 %v903
    %1365 = vmatprep.subr.mxu0 %v899
    %1366 = vmatpush1.msra.mxu0 %v898
    %1367 = vmatprep.subr.mxu0 %v894
    %1368 = vmatpush1.msra.mxu0 %v893
    %1369 = vmatprep.subr.mxu0 %v889
    %1370 = vmatpush1.msra.mxu0 %v888
    %1371 = vmatprep.subr.mxu0 %v884
    %1372 = vmatpush1.msra.mxu0 %v883
    %1373 = vmatprep.subr.mxu0 %v879
    %1374 = vmatpush1.msra.mxu0 %v878
    %1375 = vmatprep.subr.mxu0 %v874
    %1376 = vmatpush1.msra.mxu0 %v873
    %1377 = vmatprep.subr.mxu0 %v1029
    %1378 = vmatpush2.msra.mxu0 %v1028
    %1379 = vmatprep.subr.mxu0 %v1024
    %1380 = vmatpush2.msra.mxu0 %v1023
    %1381 = vmatprep.subr.mxu0 %v1019
    %1382 = vmatpush2.msra.mxu0 %v1018
    %1383 = vmatprep.subr.mxu0 %v1014
    %1384 = vmatpush2.msra.mxu0 %v1013
    %1385 = vmatprep.subr.mxu0 %v1009
    %1386 = vmatpush2.msra.mxu0 %v1008
    %1387 = vmatprep.subr.mxu0 %v1004
    %1388 = vmatpush2.msra.mxu0 %v1003
    %1389 = vmatprep.subr.mxu0 %v999
    %1390 = vmatpush2.msra.mxu0 %v998
    %1391 = vmatprep.subr.mxu0 %v994
    %1392 = vmatpush2.msra.mxu0 %v993
    %1393 = vmatprep.subr.mxu0 %v989
    %1394 = vmatpush2.msra.mxu0 %v988
    %1395 = vmatprep.subr.mxu0 %v984
    %1396 = vmatpush2.msra.mxu0 %v983
    %1397 = vmatprep.subr.mxu0 %v979
    %1398 = vmatpush2.msra.mxu0 %v978
    %1399 = vmatprep.subr.mxu0 %v974
    %1400 = vmatpush2.msra.mxu0 %v973
    %1401 = vmatprep.subr.mxu0 %v969
    %1402 = vmatpush2.msra.mxu0 %v968
    %1403 = vmatprep.subr.mxu0 %v964
    %1404 = vmatpush2.msra.mxu0 %v963
    %1405 = vmatprep.subr.mxu0 %v959
    %1406 = vmatpush2.msra.mxu0 %v958
    %1407 = vmatprep.subr.mxu0 %v954
    %1408 = vmatpush2.msra.mxu0 %v953
    %1409 = vmatprep.mubr.f32.mxu0 %v86
    %1410 = vmatmul.mubr.f32.gmra.mxu0 %v85
    %v1411 = vpop.f32.mrf.mxu0
    %v1412 = vadd.f32 0.0, %v1411
    %v1413 = vpop.f32.mrf.mxu0
    %v1414 = vadd.f32 0.0, %v1413
    %1415 = vmatprep.mubr.f32.mxu0 %v90
    %1416 = vmatmul.mubr.f32.gmra.mxu0 %v89
    %v1417 = vpop.f32.mrf.mxu0
    %v1418 = vadd.f32 0.0, %v1417
    %v1419 = vpop.f32.mrf.mxu0
    %v1420 = vadd.f32 0.0, %v1419
    %1421 = vdwg.mxu0
    %1422 = vmatprep.subr.mxu0 %v1109
    %1423 = vmatpush1.msra.mxu0 %v1108
    %1424 = vmatprep.subr.mxu0 %v1104
    %1425 = vmatpush1.msra.mxu0 %v1103
    %1426 = vmatprep.subr.mxu0 %v1099
    %1427 = vmatpush1.msra.mxu0 %v1098
    %1428 = vmatprep.subr.mxu0 %v1094
    %1429 = vmatpush1.msra.mxu0 %v1093
    %1430 = vmatprep.subr.mxu0 %v1089
    %1431 = vmatpush1.msra.mxu0 %v1088
    %1432 = vmatprep.subr.mxu0 %v1084
    %1433 = vmatpush1.msra.mxu0 %v1083
    %1434 = vmatprep.subr.mxu0 %v1079
    %1435 = vmatpush1.msra.mxu0 %v1078
    %1436 = vmatprep.subr.mxu0 %v1074
    %1437 = vmatpush1.msra.mxu0 %v1073
    %1438 = vmatprep.subr.mxu0 %v1069
    %1439 = vmatpush1.msra.mxu0 %v1068
    %1440 = vmatprep.subr.mxu0 %v1064
    %1441 = vmatpush1.msra.mxu0 %v1063
    %1442 = vmatprep.subr.mxu0 %v1059
    %1443 = vmatpush1.msra.mxu0 %v1058
    %1444 = vmatprep.subr.mxu0 %v1054
    %1445 = vmatpush1.msra.mxu0 %v1053
    %1446 = vmatprep.subr.mxu0 %v1049
    %1447 = vmatpush1.msra.mxu0 %v1048
    %1448 = vmatprep.subr.mxu0 %v1044
    %1449 = vmatpush1.msra.mxu0 %v1043
    %1450 = vmatprep.subr.mxu0 %v1039
    %1451 = vmatpush1.msra.mxu0 %v1038
    %1452 = vmatprep.subr.mxu0 %v1034
    %1453 = vmatpush1.msra.mxu0 %v1033
    %1454 = vmatprep.subr.mxu0 %v1189
    %1455 = vmatpush2.msra.mxu0 %v1188
    %1456 = vmatprep.subr.mxu0 %v1184
    %1457 = vmatpush2.msra.mxu0 %v1183
    %1458 = vmatprep.subr.mxu0 %v1179
    %1459 = vmatpush2.msra.mxu0 %v1178
    %1460 = vmatprep.subr.mxu0 %v1174
    %1461 = vmatpush2.msra.mxu0 %v1173
    %1462 = vmatprep.subr.mxu0 %v1169
    %1463 = vmatpush2.msra.mxu0 %v1168
    %1464 = vmatprep.subr.mxu0 %v1164
    %1465 = vmatpush2.msra.mxu0 %v1163
    %1466 = vmatprep.subr.mxu0 %v1159
    %1467 = vmatpush2.msra.mxu0 %v1158
    %1468 = vmatprep.subr.mxu0 %v1154
    %1469 = vmatpush2.msra.mxu0 %v1153
    %1470 = vmatprep.subr.mxu0 %v1149
    %1471 = vmatpush2.msra.mxu0 %v1148
    %1472 = vmatprep.subr.mxu0 %v1144
    %1473 = vmatpush2.msra.mxu0 %v1143
    %1474 = vmatprep.subr.mxu0 %v1139
    %1475 = vmatpush2.msra.mxu0 %v1138
    %1476 = vmatprep.subr.mxu0 %v1134
    %1477 = vmatpush2.msra.mxu0 %v1133
    %1478 = vmatprep.subr.mxu0 %v1129
    %1479 = vmatpush2.msra.mxu0 %v1128
    %1480 = vmatprep.subr.mxu0 %v1124
    %1481 = vmatpush2.msra.mxu0 %v1123
    %1482 = vmatprep.subr.mxu0 %v1119
    %1483 = vmatpush2.msra.mxu0 %v1118
    %1484 = vmatprep.subr.mxu0 %v1114
    %1485 = vmatpush2.msra.mxu0 %v1113
    %1486 = vmatprep.mubr.f32.mxu0 %v88
    %1487 = vmatmul.mubr.f32.gmra.mxu0 %v87
    %v1488 = vpop.f32.mrf.mxu0
    %v1489 = vadd.f32 %v1412, %v1488
    %v1490 = vpop.f32.mrf.mxu0
    %v1491 = vadd.f32 %v1414, %v1490
    %1492 = vmatprep.mubr.f32.mxu0 %v92
    %1493 = vmatmul.mubr.f32.gmra.mxu0 %v91
    %v1494 = vpop.f32.mrf.mxu0
    %v1495 = vadd.f32 %v1418, %v1494
    %v1496 = vpop.f32.mrf.mxu0
    %v1497 = vadd.f32 %v1420, %v1496
    %1498 = vdwg.mxu0
    %1499 = vmatprep.subr.mxu0 0.0
    %1500 = vmatpush1.msra.mxu0 %v950
    %1501 = vmatprep.subr.mxu0 0.0
    %1502 = vmatpush1.msra.mxu0 %v945
    %1503 = vmatprep.subr.mxu0 0.0
    %1504 = vmatpush1.msra.mxu0 %v940
    %1505 = vmatprep.subr.mxu0 0.0
    %1506 = vmatpush1.msra.mxu0 %v935
    %1507 = vmatprep.subr.mxu0 0.0
    %1508 = vmatpush1.msra.mxu0 %v930
    %1509 = vmatprep.subr.mxu0 0.0
    %1510 = vmatpush1.msra.mxu0 %v925
    %1511 = vmatprep.subr.mxu0 0.0
    %1512 = vmatpush1.msra.mxu0 %v920
    %1513 = vmatprep.subr.mxu0 0.0
    %1514 = vmatpush1.msra.mxu0 %v915
    %1515 = vmatprep.subr.mxu0 0.0
    %1516 = vmatpush1.msra.mxu0 %v910
    %1517 = vmatprep.subr.mxu0 0.0
    %1518 = vmatpush1.msra.mxu0 %v905
    %1519 = vmatprep.subr.mxu0 0.0
    %1520 = vmatpush1.msra.mxu0 %v900
    %1521 = vmatprep.subr.mxu0 0.0
    %1522 = vmatpush1.msra.mxu0 %v895
    %1523 = vmatprep.subr.mxu0 0.0
    %1524 = vmatpush1.msra.mxu0 %v890
    %1525 = vmatprep.subr.mxu0 0.0
    %1526 = vmatpush1.msra.mxu0 %v885
    %1527 = vmatprep.subr.mxu0 0.0
    %1528 = vmatpush1.msra.mxu0 %v880
    %1529 = vmatprep.subr.mxu0 0.0
    %1530 = vmatpush1.msra.mxu0 %v875
    %1531 = vmatprep.subr.mxu0 0.0
    %1532 = vmatpush2.msra.mxu0 %v1030
    %1533 = vmatprep.subr.mxu0 0.0
    %1534 = vmatpush2.msra.mxu0 %v1025
    %1535 = vmatprep.subr.mxu0 0.0
    %1536 = vmatpush2.msra.mxu0 %v1020
    %1537 = vmatprep.subr.mxu0 0.0
    %1538 = vmatpush2.msra.mxu0 %v1015
    %1539 = vmatprep.subr.mxu0 0.0
    %1540 = vmatpush2.msra.mxu0 %v1010
    %1541 = vmatprep.subr.mxu0 0.0
    %1542 = vmatpush2.msra.mxu0 %v1005
    %1543 = vmatprep.subr.mxu0 0.0
    %1544 = vmatpush2.msra.mxu0 %v1000
    %1545 = vmatprep.subr.mxu0 0.0
    %1546 = vmatpush2.msra.mxu0 %v995
    %1547 = vmatprep.subr.mxu0 0.0
    %1548 = vmatpush2.msra.mxu0 %v990
    %1549 = vmatprep.subr.mxu0 0.0
    %1550 = vmatpush2.msra.mxu0 %v985
    %1551 = vmatprep.subr.mxu0 0.0
    %1552 = vmatpush2.msra.mxu0 %v980
    %1553 = vmatprep.subr.mxu0 0.0
    %1554 = vmatpush2.msra.mxu0 %v975
    %1555 = vmatprep.subr.mxu0 0.0
    %1556 = vmatpush2.msra.mxu0 %v970
    %1557 = vmatprep.subr.mxu0 0.0
    %1558 = vmatpush2.msra.mxu0 %v965
    %1559 = vmatprep.subr.mxu0 0.0
    %1560 = vmatpush2.msra.mxu0 %v960
    %1561 = vmatprep.subr.mxu0 0.0
    %1562 = vmatpush2.msra.mxu0 %v955
    %1563 = vmatprep.mubr.f32.mxu0 %v86
    %1564 = vmatmul.mubr.f32.gmra.mxu0 %v85
    %v1565 = vpop.f32.mrf.mxu0
    %v1566 = vadd.f32 0.0, %v1565
    %v1567 = vpop.f32.mrf.mxu0
    %1568 = vmatprep.mubr.f32.mxu0 %v90
    %1569 = vmatmul.mubr.f32.gmra.mxu0 %v89
    %v1570 = vpop.f32.mrf.mxu0
    %v1571 = vadd.f32 0.0, %v1570
    %v1572 = vpop.f32.mrf.mxu0
    %1573 = vdwg.mxu0
    %1574 = vmatprep.subr.mxu0 0.0
    %1575 = vmatpush1.msra.mxu0 %v1110
    %1576 = vmatprep.subr.mxu0 0.0
    %1577 = vmatpush1.msra.mxu0 %v1105
    %1578 = vmatprep.subr.mxu0 0.0
    %1579 = vmatpush1.msra.mxu0 %v1100
    %1580 = vmatprep.subr.mxu0 0.0
    %1581 = vmatpush1.msra.mxu0 %v1095
    %1582 = vmatprep.subr.mxu0 0.0
    %1583 = vmatpush1.msra.mxu0 %v1090
    %1584 = vmatprep.subr.mxu0 0.0
    %1585 = vmatpush1.msra.mxu0 %v1085
    %1586 = vmatprep.subr.mxu0 0.0
    %1587 = vmatpush1.msra.mxu0 %v1080
    %1588 = vmatprep.subr.mxu0 0.0
    %1589 = vmatpush1.msra.mxu0 %v1075
    %1590 = vmatprep.subr.mxu0 0.0
    %1591 = vmatpush1.msra.mxu0 %v1070
    %1592 = vmatprep.subr.mxu0 0.0
    %1593 = vmatpush1.msra.mxu0 %v1065
    %1594 = vmatprep.subr.mxu0 0.0
    %1595 = vmatpush1.msra.mxu0 %v1060
    %1596 = vmatprep.subr.mxu0 0.0
    %1597 = vmatpush1.msra.mxu0 %v1055
    %1598 = vmatprep.subr.mxu0 0.0
    %1599 = vmatpush1.msra.mxu0 %v1050
    %1600 = vmatprep.subr.mxu0 0.0
    %1601 = vmatpush1.msra.mxu0 %v1045
    %1602 = vmatprep.subr.mxu0 0.0
    %1603 = vmatpush1.msra.mxu0 %v1040
    %1604 = vmatprep.subr.mxu0 0.0
    %1605 = vmatpush1.msra.mxu0 %v1035
    %1606 = vmatprep.subr.mxu0 0.0
    %1607 = vmatpush2.msra.mxu0 %v1190
    %1608 = vmatprep.subr.mxu0 0.0
    %1609 = vmatpush2.msra.mxu0 %v1185
    %1610 = vmatprep.subr.mxu0 0.0
    %1611 = vmatpush2.msra.mxu0 %v1180
    %1612 = vmatprep.subr.mxu0 0.0
    %1613 = vmatpush2.msra.mxu0 %v1175
    %1614 = vmatprep.subr.mxu0 0.0
    %1615 = vmatpush2.msra.mxu0 %v1170
    %1616 = vmatprep.subr.mxu0 0.0
    %1617 = vmatpush2.msra.mxu0 %v1165
    %1618 = vmatprep.subr.mxu0 0.0
    %1619 = vmatpush2.msra.mxu0 %v1160
    %1620 = vmatprep.subr.mxu0 0.0
    %1621 = vmatpush2.msra.mxu0 %v1155
    %1622 = vmatprep.subr.mxu0 0.0
    %1623 = vmatpush2.msra.mxu0 %v1150
    %1624 = vmatprep.subr.mxu0 0.0
    %1625 = vmatpush2.msra.mxu0 %v1145
    %1626 = vmatprep.subr.mxu0 0.0
    %1627 = vmatpush2.msra.mxu0 %v1140
    %1628 = vmatprep.subr.mxu0 0.0
    %1629 = vmatpush2.msra.mxu0 %v1135
    %1630 = vmatprep.subr.mxu0 0.0
    %1631 = vmatpush2.msra.mxu0 %v1130
    %1632 = vmatprep.subr.mxu0 0.0
    %1633 = vmatpush2.msra.mxu0 %v1125
    %1634 = vmatprep.subr.mxu0 0.0
    %1635 = vmatpush2.msra.mxu0 %v1120
    %1636 = vmatprep.subr.mxu0 0.0
    %1637 = vmatpush2.msra.mxu0 %v1115
    %1638 = vmatprep.mubr.f32.mxu0 %v88
    %1639 = vmatmul.mubr.f32.gmra.mxu0 %v87
    %v1640 = vpop.f32.mrf.mxu0
    %v1641 = vadd.f32 %v1566, %v1640
    %v1642 = vpop.f32.mrf.mxu0
    %1643 = vmatprep.mubr.f32.mxu0 %v92
    %1644 = vmatmul.mubr.f32.gmra.mxu0 %v91
    %v1645 = vpop.f32.mrf.mxu0
    %v1646 = vadd.f32 %v1571, %v1645
    %v1647 = vpop.f32.mrf.mxu0
    %1648 = vdwg.mxu0
    %v1649 = vmul.f32 %v557, %v557
    %v1650 = vmul.f32 %v559, %v559
    %v1651 = vmul.f32 %v711, %v711
    %v1652 = vmul.f32 %v713, %v713
    %v1653 = vmul.f32 %v863, %v863
    %v1654 = vmul.f32 %v563, %v563
    %v1655 = vmul.f32 %v565, %v565
    %v1656 = vmul.f32 %v717, %v717
    %v1657 = vmul.f32 %v719, %v719
    %v1658 = vmul.f32 %v868, %v868
    %v1659 = vmul.f32 %v1335, %v1335
    %v1660 = vmul.f32 %v1337, %v1337
    %v1661 = vmul.f32 %v1489, %v1489
    %v1662 = vmul.f32 %v1491, %v1491
    %v1663 = vmul.f32 %v1641, %v1641
    %v1664 = vmul.f32 %v1341, %v1341
    %v1665 = vmul.f32 %v1343, %v1343
    %v1666 = vmul.f32 %v1495, %v1495
    %v1667 = vmul.f32 %v1497, %v1497
    %v1668 = vmul.f32 %v1646, %v1646
    %v1669 = vadd.f32 %v1649, %v1659
    %v1670 = vadd.f32 %v1650, %v1660
    %v1671 = vadd.f32 %v1651, %v1661
    %v1672 = vadd.f32 %v1652, %v1662
    %v1673 = vadd.f32 %v1653, %v1663
    %v1674 = vadd.f32 %v1654, %v1664
    %v1675 = vadd.f32 %v1655, %v1665
    %v1676 = vadd.f32 %v1656, %v1666
    %v1677 = vadd.f32 %v1657, %v1667
    %v1678 = vadd.f32 %v1658, %v1668
    %v1679 = vmax.f32 %v1669, 1.1920929e-07
    %v1680 = vmax.f32 %v1670, 1.1920929e-07
    %v1681 = vmax.f32 %v1671, 1.1920929e-07
    %v1682 = vmax.f32 %v1672, 1.1920929e-07
    %v1683 = vmax.f32 %v1673, 1.1920929e-07
    %v1684 = vmax.f32 %v1674, 1.1920929e-07
    %v1685 = vmax.f32 %v1675, 1.1920929e-07
    %v1686 = vmax.f32 %v1676, 1.1920929e-07
    %v1687 = vmax.f32 %v1677, 1.1920929e-07
    %v1688 = vmax.f32 %v1678, 1.1920929e-07
    %v1689 = vrsqrt.pop %v1679
    %v1690 = vmul.f32 %v1679, %v1689
    %vm1691 = vcmp.eq.f32.partialorder %v1679, inf
    %v1692 = vsel %vm1691, %v1679, %v1690
    %vm1693 = vcmp.eq.f32.partialorder %v1679, 0.0
    %v1694 = vand.u32 %v1679, 2147483648
    %v1695 = vsel %vm1693, %v1694, %v1692
    %v1696 = vrsqrt.pop %v1680
    %v1697 = vmul.f32 %v1680, %v1696
    %vm1698 = vcmp.eq.f32.partialorder %v1680, inf
    %v1699 = vsel %vm1698, %v1680, %v1697
    %vm1700 = vcmp.eq.f32.partialorder %v1680, 0.0
    %v1701 = vand.u32 %v1680, 2147483648
    %v1702 = vsel %vm1700, %v1701, %v1699
    %v1703 = vrsqrt.pop %v1681
    %v1704 = vmul.f32 %v1681, %v1703
    %vm1705 = vcmp.eq.f32.partialorder %v1681, inf
    %v1706 = vsel %vm1705, %v1681, %v1704
    %vm1707 = vcmp.eq.f32.partialorder %v1681, 0.0
    %v1708 = vand.u32 %v1681, 2147483648
    %v1709 = vsel %vm1707, %v1708, %v1706
    %v1710 = vrsqrt.pop %v1682
    %v1711 = vmul.f32 %v1682, %v1710
    %vm1712 = vcmp.eq.f32.partialorder %v1682, inf
    %v1713 = vsel %vm1712, %v1682, %v1711
    %vm1714 = vcmp.eq.f32.partialorder %v1682, 0.0
    %v1715 = vand.u32 %v1682, 2147483648
    %v1716 = vsel %vm1714, %v1715, %v1713
    %v1717 = vrsqrt.pop %v1683
    %v1718 = vmul.f32 %v1683, %v1717
    %vm1719 = vcmp.eq.f32.partialorder %v1683, inf
    %v1720 = vsel %vm1719, %v1683, %v1718
    %vm1721 = vcmp.eq.f32.partialorder %v1683, 0.0
    %v1722 = vand.u32 %v1683, 2147483648
    %v1723 = vsel %vm1721, %v1722, %v1720
    %v1724 = vrsqrt.pop %v1684
    %v1725 = vmul.f32 %v1684, %v1724
    %vm1726 = vcmp.eq.f32.partialorder %v1684, inf
    %v1727 = vsel %vm1726, %v1684, %v1725
    %vm1728 = vcmp.eq.f32.partialorder %v1684, 0.0
    %v1729 = vand.u32 %v1684, 2147483648
    %v1730 = vsel %vm1728, %v1729, %v1727
    %v1731 = vrsqrt.pop %v1685
    %v1732 = vmul.f32 %v1685, %v1731
    %vm1733 = vcmp.eq.f32.partialorder %v1685, inf
    %v1734 = vsel %vm1733, %v1685, %v1732
    %vm1735 = vcmp.eq.f32.partialorder %v1685, 0.0
    %v1736 = vand.u32 %v1685, 2147483648
    %v1737 = vsel %vm1735, %v1736, %v1734
    %v1738 = vrsqrt.pop %v1686
    %v1739 = vmul.f32 %v1686, %v1738
    %vm1740 = vcmp.eq.f32.partialorder %v1686, inf
    %v1741 = vsel %vm1740, %v1686, %v1739
    %vm1742 = vcmp.eq.f32.partialorder %v1686, 0.0
    %v1743 = vand.u32 %v1686, 2147483648
    %v1744 = vsel %vm1742, %v1743, %v1741
    %v1745 = vrsqrt.pop %v1687
    %v1746 = vmul.f32 %v1687, %v1745
    %vm1747 = vcmp.eq.f32.partialorder %v1687, inf
    %v1748 = vsel %vm1747, %v1687, %v1746
    %vm1749 = vcmp.eq.f32.partialorder %v1687, 0.0
    %v1750 = vand.u32 %v1687, 2147483648
    %v1751 = vsel %vm1749, %v1750, %v1748
    %v1752 = vrsqrt.pop %v1688
    %v1753 = vmul.f32 %v1688, %v1752
    %vm1754 = vcmp.eq.f32.partialorder %v1688, inf
    %v1755 = vsel %vm1754, %v1688, %v1753
    %vm1756 = vcmp.eq.f32.partialorder %v1688, 0.0
    %v1757 = vand.u32 %v1688, 2147483648
    %v1758 = vsel %vm1756, %v1757, %v1755
    %1759 = vst [vmem:[#allocation3] sm:$0xff] %v1695
    %1760 = vst [vmem:[#allocation3 + $0x8] sm:$0xff] %v1702
    %1761 = vst [vmem:[#allocation3 + $0x10] sm:$0xff] %v1709
    %1762 = vst [vmem:[#allocation3 + $0x18] sm:$0xff] %v1716
    %vm1763 = vcmask 31744
    %1764 = vst.msk [vmem:[#allocation3 + $0x20] sm:$0xff] %vm1763, %v1723
    %1765 = vst [vmem:[#allocation3 + $0x28] sm:$0xff] %v1730
    %1766 = vst [vmem:[#allocation3 + $0x30] sm:$0xff] %v1737
    %1767 = vst [vmem:[#allocation3 + $0x38] sm:$0xff] %v1744
    %1768 = vst [vmem:[#allocation3 + $0x40] sm:$0xff] %v1751
    %1769 = vst.msk [vmem:[#allocation3 + $0x48] sm:$0xff] %vm1763, %v1758
    %v1770 = vadd.f32 %v1335, 1.1920929e-07
    %v1771 = vadd.f32 %v1337, 1.1920929e-07
    %v1772 = vadd.f32 %v1489, 1.1920929e-07
    %v1773 = vadd.f32 %v1491, 1.1920929e-07
    %v1774 = vadd.f32 %v1641, 1.1920929e-07
    %v1775 = vadd.f32 %v1341, 1.1920929e-07
    %v1776 = vadd.f32 %v1343, 1.1920929e-07
    %v1777 = vadd.f32 %v1495, 1.1920929e-07
    %v1778 = vadd.f32 %v1497, 1.1920929e-07
    %v1779 = vadd.f32 %v1646, 1.1920929e-07
    %v1780 = vadd.f32 %v557, 1.1920929e-07
    %v1781 = vadd.f32 %v559, 1.1920929e-07
    %v1782 = vadd.f32 %v711, 1.1920929e-07
    %v1783 = vadd.f32 %v713, 1.1920929e-07
    %v1784 = vadd.f32 %v863, 1.1920929e-07
    %v1785 = vadd.f32 %v563, 1.1920929e-07
    %v1786 = vadd.f32 %v565, 1.1920929e-07
    %v1787 = vadd.f32 %v717, 1.1920929e-07
    %v1788 = vadd.f32 %v719, 1.1920929e-07
    %v1789 = vadd.f32 %v868, 1.1920929e-07
    %v1790 = vand.u32 2147483647, %v1780
    %v1791 = vand.u32 2147483647, %v1781
    %v1792 = vand.u32 2147483647, %v1782
    %v1793 = vand.u32 2147483647, %v1783
    %v1794 = vand.u32 2147483647, %v1784
    %v1795 = vand.u32 2147483647, %v1785
    %v1796 = vand.u32 2147483647, %v1786
    %v1797 = vand.u32 2147483647, %v1787
    %v1798 = vand.u32 2147483647, %v1788
    %v1799 = vand.u32 2147483647, %v1789
    %v1800 = vand.u32 2147483647, %v1770
    %v1801 = vand.u32 2147483647, %v1771
    %v1802 = vand.u32 2147483647, %v1772
    %v1803 = vand.u32 2147483647, %v1773
    %v1804 = vand.u32 2147483647, %v1774
    %v1805 = vand.u32 2147483647, %v1775
    %v1806 = vand.u32 2147483647, %v1776
    %v1807 = vand.u32 2147483647, %v1777
    %v1808 = vand.u32 2147483647, %v1778
    %v1809 = vand.u32 2147483647, %v1779
    %v1810 = vmax.f32 %v1790, %v1800
    %v1811 = vmax.f32 %v1791, %v1801
    %v1812 = vmax.f32 %v1792, %v1802
    %v1813 = vmax.f32 %v1793, %v1803
    %v1814 = vmax.f32 %v1794, %v1804
    %v1815 = vmax.f32 %v1795, %v1805
    %v1816 = vmax.f32 %v1796, %v1806
    %v1817 = vmax.f32 %v1797, %v1807
    %v1818 = vmax.f32 %v1798, %v1808
    %v1819 = vmax.f32 %v1799, %v1809
    %v1820 = vmax.f32 %v1810, 1e-30
    %v1821 = vmax.f32 %v1811, 1e-30
    %v1822 = vmax.f32 %v1812, 1e-30
    %v1823 = vmax.f32 %v1813, 1e-30
    %v1824 = vmax.f32 %v1814, 1e-30
    %v1825 = vmax.f32 %v1815, 1e-30
    %v1826 = vmax.f32 %v1816, 1e-30
    %v1827 = vmax.f32 %v1817, 1e-30
    %v1828 = vmax.f32 %v1818, 1e-30
    %v1829 = vmax.f32 %v1819, 1e-30
    %v1830 = vmin.f32 %v1790, %v1800
    %v1831 = vmin.f32 %v1791, %v1801
    %v1832 = vmin.f32 %v1792, %v1802
    %v1833 = vmin.f32 %v1793, %v1803
    %v1834 = vmin.f32 %v1794, %v1804
    %v1835 = vmin.f32 %v1795, %v1805
    %v1836 = vmin.f32 %v1796, %v1806
    %v1837 = vmin.f32 %v1797, %v1807
    %v1838 = vmin.f32 %v1798, %v1808
    %v1839 = vmin.f32 %v1799, %v1809
    %v1840 = vrcp.pop %v1820
    %v1841 = vrcp.pop %v1821
    %v1842 = vrcp.pop %v1822
    %v1843 = vrcp.pop %v1823
    %v1844 = vrcp.pop %v1824
    %v1845 = vrcp.pop %v1825
    %v1846 = vrcp.pop %v1826
    %v1847 = vrcp.pop %v1827
    %v1848 = vrcp.pop %v1828
    %v1849 = vrcp.pop %v1829
    %v1850 = vmul.f32 %v1830, %v1840
    %v1851 = vmul.f32 %v1831, %v1841
    %v1852 = vmul.f32 %v1832, %v1842
    %v1853 = vmul.f32 %v1833, %v1843
    %v1854 = vmul.f32 %v1834, %v1844
    %v1855 = vmul.f32 %v1835, %v1845
    %v1856 = vmul.f32 %v1836, %v1846
    %v1857 = vmul.f32 %v1837, %v1847
    %v1858 = vmul.f32 %v1838, %v1848
    %v1859 = vmul.f32 %v1839, %v1849
    %v1860 = vmul.f32 %v1850, %v1850
    %v1861 = vmul.f32 %v1851, %v1851
    %v1862 = vmul.f32 %v1852, %v1852
    %v1863 = vmul.f32 %v1853, %v1853
    %v1864 = vmul.f32 %v1854, %v1854
    %v1865 = vmul.f32 %v1855, %v1855
    %v1866 = vmul.f32 %v1856, %v1856
    %v1867 = vmul.f32 %v1857, %v1857
    %v1868 = vmul.f32 %v1858, %v1858
    %v1869 = vmul.f32 %v1859, %v1859
    %v1870 = vmul.f32 %v1860, 0.0208351
    %v1871 = vmul.f32 %v1861, 0.0208351
    %v1872 = vmul.f32 %v1862, 0.0208351
    %v1873 = vmul.f32 %v1863, 0.0208351
    %v1874 = vmul.f32 %v1864, 0.0208351
    %v1875 = vmul.f32 %v1865, 0.0208351
    %v1876 = vmul.f32 %v1866, 0.0208351
    %v1877 = vmul.f32 %v1867, 0.0208351
    %v1878 = vmul.f32 %v1868, 0.0208351
    %v1879 = vmul.f32 %v1869, 0.0208351
    %v1880 = vadd.f32 %v1870, -0.085133
    %v1881 = vadd.f32 %v1871, -0.085133
    %v1882 = vadd.f32 %v1872, -0.085133
    %v1883 = vadd.f32 %v1873, -0.085133
    %v1884 = vadd.f32 %v1874, -0.085133
    %v1885 = vadd.f32 %v1875, -0.085133
    %v1886 = vadd.f32 %v1876, -0.085133
    %v1887 = vadd.f32 %v1877, -0.085133
    %v1888 = vadd.f32 %v1878, -0.085133
    %v1889 = vadd.f32 %v1879, -0.085133
    %v1890 = vmul.f32 %v1880, %v1860
    %v1891 = vmul.f32 %v1881, %v1861
    %v1892 = vmul.f32 %v1882, %v1862
    %v1893 = vmul.f32 %v1883, %v1863
    %v1894 = vmul.f32 %v1884, %v1864
    %v1895 = vmul.f32 %v1885, %v1865
    %v1896 = vmul.f32 %v1886, %v1866
    %v1897 = vmul.f32 %v1887, %v1867
    %v1898 = vmul.f32 %v1888, %v1868
    %v1899 = vmul.f32 %v1889, %v1869
    %v1900 = vadd.f32 %v1890, 0.180141
    %v1901 = vadd.f32 %v1891, 0.180141
    %v1902 = vadd.f32 %v1892, 0.180141
    %v1903 = vadd.f32 %v1893, 0.180141
    %v1904 = vadd.f32 %v1894, 0.180141
    %v1905 = vadd.f32 %v1895, 0.180141
    %v1906 = vadd.f32 %v1896, 0.180141
    %v1907 = vadd.f32 %v1897, 0.180141
    %v1908 = vadd.f32 %v1898, 0.180141
    %v1909 = vadd.f32 %v1899, 0.180141
    %v1910 = vmul.f32 %v1900, %v1860
    %v1911 = vmul.f32 %v1901, %v1861
    %v1912 = vmul.f32 %v1902, %v1862
    %v1913 = vmul.f32 %v1903, %v1863
    %v1914 = vmul.f32 %v1904, %v1864
    %v1915 = vmul.f32 %v1905, %v1865
    %v1916 = vmul.f32 %v1906, %v1866
    %v1917 = vmul.f32 %v1907, %v1867
    %v1918 = vmul.f32 %v1908, %v1868
    %v1919 = vmul.f32 %v1909, %v1869
    %v1920 = vadd.f32 %v1910, -0.3302995
    %v1921 = vadd.f32 %v1911, -0.3302995
    %v1922 = vadd.f32 %v1912, -0.3302995
    %v1923 = vadd.f32 %v1913, -0.3302995
    %v1924 = vadd.f32 %v1914, -0.3302995
    %v1925 = vadd.f32 %v1915, -0.3302995
    %v1926 = vadd.f32 %v1916, -0.3302995
    %v1927 = vadd.f32 %v1917, -0.3302995
    %v1928 = vadd.f32 %v1918, -0.3302995
    %v1929 = vadd.f32 %v1919, -0.3302995
    %v1930 = vmul.f32 %v1920, %v1860
    %v1931 = vmul.f32 %v1921, %v1861
    %v1932 = vmul.f32 %v1922, %v1862
    %v1933 = vmul.f32 %v1923, %v1863
    %v1934 = vmul.f32 %v1924, %v1864
    %v1935 = vmul.f32 %v1925, %v1865
    %v1936 = vmul.f32 %v1926, %v1866
    %v1937 = vmul.f32 %v1927, %v1867
    %v1938 = vmul.f32 %v1928, %v1868
    %v1939 = vmul.f32 %v1929, %v1869
    %v1940 = vadd.f32 %v1930, 0.999866
    %v1941 = vadd.f32 %v1931, 0.999866
    %v1942 = vadd.f32 %v1932, 0.999866
    %v1943 = vadd.f32 %v1933, 0.999866
    %v1944 = vadd.f32 %v1934, 0.999866
    %v1945 = vadd.f32 %v1935, 0.999866
    %v1946 = vadd.f32 %v1936, 0.999866
    %v1947 = vadd.f32 %v1937, 0.999866
    %v1948 = vadd.f32 %v1938, 0.999866
    %v1949 = vadd.f32 %v1939, 0.999866
    %v1950 = vmul.f32 %v1940, %v1850
    %v1951 = vmul.f32 %v1941, %v1851
    %v1952 = vmul.f32 %v1942, %v1852
    %v1953 = vmul.f32 %v1943, %v1853
    %v1954 = vmul.f32 %v1944, %v1854
    %v1955 = vmul.f32 %v1945, %v1855
    %v1956 = vmul.f32 %v1946, %v1856
    %v1957 = vmul.f32 %v1947, %v1857
    %v1958 = vmul.f32 %v1948, %v1858
    %v1959 = vmul.f32 %v1949, %v1859
    %vm1960 = vcmp.gt.f32.partialorder %v1800, %v1790
    %vm1961 = vcmp.gt.f32.partialorder %v1801, %v1791
    %vm1962 = vcmp.gt.f32.partialorder %v1802, %v1792
    %vm1963 = vcmp.gt.f32.partialorder %v1803, %v1793
    %vm1964 = vcmp.gt.f32.partialorder %v1804, %v1794
    %vm1965 = vcmp.gt.f32.partialorder %v1805, %v1795
    %vm1966 = vcmp.gt.f32.partialorder %v1806, %v1796
    %vm1967 = vcmp.gt.f32.partialorder %v1807, %v1797
    %vm1968 = vcmp.gt.f32.partialorder %v1808, %v1798
    %vm1969 = vcmp.gt.f32.partialorder %v1809, %v1799
    %v1970 = vsub.f32 1.5707964, %v1950
    %v1971 = vsub.f32 1.5707964, %v1951
    %v1972 = vsub.f32 1.5707964, %v1952
    %v1973 = vsub.f32 1.5707964, %v1953
    %v1974 = vsub.f32 1.5707964, %v1954
    %v1975 = vsub.f32 1.5707964, %v1955
    %v1976 = vsub.f32 1.5707964, %v1956
    %v1977 = vsub.f32 1.5707964, %v1957
    %v1978 = vsub.f32 1.5707964, %v1958
    %v1979 = vsub.f32 1.5707964, %v1959
    %v1980 = vsel %vm1960, %v1970, %v1950
    %v1981 = vsel %vm1961, %v1971, %v1951
    %v1982 = vsel %vm1962, %v1972, %v1952
    %v1983 = vsel %vm1963, %v1973, %v1953
    %v1984 = vsel %vm1964, %v1974, %v1954
    %v1985 = vsel %vm1965, %v1975, %v1955
    %v1986 = vsel %vm1966, %v1976, %v1956
    %v1987 = vsel %vm1967, %v1977, %v1957
    %v1988 = vsel %vm1968, %v1978, %v1958
    %v1989 = vsel %vm1969, %v1979, %v1959
    %vm1990 = vcmp.lt.f32.partialorder %v1780, 0.0
    %vm1991 = vcmp.lt.f32.partialorder %v1781, 0.0
    %vm1992 = vcmp.lt.f32.partialorder %v1782, 0.0
    %vm1993 = vcmp.lt.f32.partialorder %v1783, 0.0
    %vm1994 = vcmp.lt.f32.partialorder %v1784, 0.0
    %vm1995 = vcmp.lt.f32.partialorder %v1785, 0.0
    %vm1996 = vcmp.lt.f32.partialorder %v1786, 0.0
    %vm1997 = vcmp.lt.f32.partialorder %v1787, 0.0
    %vm1998 = vcmp.lt.f32.partialorder %v1788, 0.0
    %vm1999 = vcmp.lt.f32.partialorder %v1789, 0.0
    %v2000 = vsub.f32 3.1415927, %v1980
    %v2001 = vsub.f32 3.1415927, %v1981
    %v2002 = vsub.f32 3.1415927, %v1982
    %v2003 = vsub.f32 3.1415927, %v1983
    %v2004 = vsub.f32 3.1415927, %v1984
    %v2005 = vsub.f32 3.1415927, %v1985
    %v2006 = vsub.f32 3.1415927, %v1986
    %v2007 = vsub.f32 3.1415927, %v1987
    %v2008 = vsub.f32 3.1415927, %v1988
    %v2009 = vsub.f32 3.1415927, %v1989
    %v2010 = vsel %vm1990, %v2000, %v1980
    %v2011 = vsel %vm1991, %v2001, %v1981
    %v2012 = vsel %vm1992, %v2002, %v1982
    %v2013 = vsel %vm1993, %v2003, %v1983
    %v2014 = vsel %vm1994, %v2004, %v1984
    %v2015 = vsel %vm1995, %v2005, %v1985
    %v2016 = vsel %vm1996, %v2006, %v1986
    %v2017 = vsel %vm1997, %v2007, %v1987
    %v2018 = vsel %vm1998, %v2008, %v1988
    %v2019 = vsel %vm1999, %v2009, %v1989
    %vm2020 = vcmp.lt.f32.partialorder %v1770, 0.0
    %vm2021 = vcmp.lt.f32.partialorder %v1771, 0.0
    %vm2022 = vcmp.lt.f32.partialorder %v1772, 0.0
    %vm2023 = vcmp.lt.f32.partialorder %v1773, 0.0
    %vm2024 = vcmp.lt.f32.partialorder %v1774, 0.0
    %vm2025 = vcmp.lt.f32.partialorder %v1775, 0.0
    %vm2026 = vcmp.lt.f32.partialorder %v1776, 0.0
    %vm2027 = vcmp.lt.f32.partialorder %v1777, 0.0
    %vm2028 = vcmp.lt.f32.partialorder %v1778, 0.0
    %vm2029 = vcmp.lt.f32.partialorder %v1779, 0.0
    %v2030 = vsub.f32 0.0, %v2010
    %v2031 = vsub.f32 0.0, %v2011
    %v2032 = vsub.f32 0.0, %v2012
    %v2033 = vsub.f32 0.0, %v2013
    %v2034 = vsub.f32 0.0, %v2014
    %v2035 = vsub.f32 0.0, %v2015
    %v2036 = vsub.f32 0.0, %v2016
    %v2037 = vsub.f32 0.0, %v2017
    %v2038 = vsub.f32 0.0, %v2018
    %v2039 = vsub.f32 0.0, %v2019
    %v2040 = vsel %vm2020, %v2030, %v2010
    %v2041 = vsel %vm2021, %v2031, %v2011
    %v2042 = vsel %vm2022, %v2032, %v2012
    %v2043 = vsel %vm2023, %v2033, %v2013
    %v2044 = vsel %vm2024, %v2034, %v2014
    %v2045 = vsel %vm2025, %v2035, %v2015
    %v2046 = vsel %vm2026, %v2036, %v2016
    %v2047 = vsel %vm2027, %v2037, %v2017
    %v2048 = vsel %vm2028, %v2038, %v2018
    %v2049 = vsel %vm2029, %v2039, %v2019
    %2050 = vst [vmem:[#allocation5] sm:$0xff] %v2040
    %2051 = vst [vmem:[#allocation5 + $0x8] sm:$0xff] %v2041
    %2052 = vst [vmem:[#allocation5 + $0x10] sm:$0xff] %v2042
    %2053 = vst [vmem:[#allocation5 + $0x18] sm:$0xff] %v2043
    %2054 = vst.msk [vmem:[#allocation5 + $0x20] sm:$0xff] %vm1763, %v2044
    %2055 = vst [vmem:[#allocation5 + $0x28] sm:$0xff] %v2045
    %2056 = vst [vmem:[#allocation5 + $0x30] sm:$0xff] %v2046
    %2057 = vst [vmem:[#allocation5 + $0x38] sm:$0xff] %v2047
    %2058 = vst [vmem:[#allocation5 + $0x40] sm:$0xff] %v2048
    %2059 = vst.msk [vmem:[#allocation5 + $0x48] sm:$0xff] %vm1763, %v2049
    // Predicated region
    $region18: #{tpu_custom_call.1} parent=1 // pred_check
      _
    $region19: #{tpu_custom_call.1} parent=1 // pred_check_branch
      %2061 = sbr.rel (0) target = $region21
    $region20: #{tpu_custom_call.1} parent=1 // pred_region
      %s2063 = ssub.s32 1280, 1280
      %2064 = vsyncadd [#allocation4], %s2063
      %s2065 = sshll.u32 [#allocation3], 4
      %s2066 = int_to_ptr.vmem [resolvable:$true] %s2065
      %2071 = dma.vmem_to_hbm [thread:$0]  %s2066, 1280, %s4, [#allocation4], 640, 640, 40
    $region21: #{tpu_custom_call.1} parent=1 // pred_fallthru
      _
    // Predicated region
    $region22: #{tpu_custom_call.1} parent=1 // pred_check
      _
    $region23: #{tpu_custom_call.1} parent=1 // pred_check_branch
      %2073 = sbr.rel (0) target = $region25
    $region24: #{tpu_custom_call.1} parent=1 // pred_region
      %s2075 = ssub.s32 1280, 1280
      %2076 = vsyncadd [#allocation6], %s2075
      %s2077 = sshll.u32 [#allocation5], 4
      %s2078 = int_to_ptr.vmem [resolvable:$true] %s2077
      %2083 = dma.vmem_to_hbm [thread:$0]  %s2078, 1280, %s5, [#allocation6], 640, 640, 40
    $region25: #{tpu_custom_call.1} parent=1 // pred_fallthru
      _
    // Predicated region
    $region26: #{tpu_custom_call.1} parent=1 // pred_check
      _
    $region27: #{tpu_custom_call.1} parent=1 // pred_check_branch
      %2085 = sbr.rel (0) target = $region29
    $region28: #{tpu_custom_call.1} parent=1 // pred_region
      %2086 = dma.done [#allocation4], 1280
    $region29: #{tpu_custom_call.1} parent=1 // pred_fallthru
      _
    // Predicated region
    $region30: #{tpu_custom_call.1} parent=1 // pred_check
      _
    $region31: #{tpu_custom_call.1} parent=1 // pred_check_branch
      %2088 = sbr.rel (0) target = $region33
    $region32: #{tpu_custom_call.1} parent=1 // pred_region
      %2089 = dma.done [#allocation6], 1280
    $region33: #{tpu_custom_call.1} parent=1 // pred_fallthru
      _
    %2090 = vsyncpa [#allocation4], 1
    %2091 = vsyncpa [#allocation6], 1

</llo_original>
